<compile_context>
chip_gen: v7x
topology: tpu7x:2x2x1
jax: 0.10.0
libtpu: 0.0.40
codegen_flags: <defaults>
</compile_context>

<pallas_src>
import functools

import numpy as np
import jax
import jax.numpy as jnp
from jax.experimental import pallas as pl
from jax.experimental.pallas import tpu as pltpu

LANE = 128            # TPU lane width; also width of the top-k scratch / outputs
NEG = -1e30           # finite "-inf" (avoids inf-inf NaN hazards)
IBIG = 2**31 - 1


# ---------------------------------------------------------------------------
# Fused kernel: log_softmax(x @ W + b) + beam scoring + per-batch top-k
# ---------------------------------------------------------------------------
def fused_step_kernel(x_ref, cum_ref, w_ref, b_ref, vals_ref, ids_ref,
                      m_s, l_s, topv_s, topi_s, *, k_out, kin, v_pad):
    vi = pl.program_id(0)
    nv = pl.num_programs(0)
    rows = x_ref.shape[0]          # B * kin rows (kin = beams feeding this step)
    tv = w_ref.shape[1]            # vocab tile width (multiple of 128)

    # ---- init accumulators on the first vocab tile -------------------------
    @pl.when(vi == 0)
    def _init():
        m_s[...] = jnp.full(m_s.shape, NEG, jnp.float32)
        l_s[...] = jnp.zeros(l_s.shape, jnp.float32)
        topv_s[...] = jnp.full(topv_s.shape, NEG, jnp.float32)
        topi_s[...] = jnp.zeros(topi_s.shape, jnp.int32)

    # ---- logits for this vocab tile (bf16 MXU matmul, f32 accumulate) ------
    logits = jnp.dot(x_ref[...], w_ref[...],
                     preferred_element_type=jnp.float32) + b_ref[...]   # (rows, tv)

    # ---- online log-sum-exp over the vocab axis -----------------------------
    m_prev = m_s[...]                                               # (rows, 1)
    m_new = jnp.maximum(m_prev, jnp.max(logits, axis=-1, keepdims=True))
    l_s[...] = (l_s[...] * jnp.exp(m_prev - m_new)
                + jnp.sum(jnp.exp(logits - m_new), axis=-1, keepdims=True))
    m_s[...] = m_new

    # ---- per-row running top-k of raw logits (order == score order) --------
    vocab_idx = vi * tv + jax.lax.broadcasted_iota(jnp.int32, logits.shape, 1)
    cand_v = jnp.concatenate([topv_s[...], logits], axis=1)          # (rows, 128+tv)
    cand_i = jnp.concatenate([topi_s[...], vocab_idx], axis=1)
    lane = jax.lax.broadcasted_iota(jnp.int32, (rows, LANE), 1)
    new_v = jnp.full((rows, LANE), NEG, jnp.float32)
    new_i = jnp.zeros((rows, LANE), jnp.int32)
    for j in range(k_out):                                           # small & static
        mx = jnp.max(cand_v, axis=1, keepdims=True)                  # (rows, 1)
        sel = jnp.min(jnp.where(cand_v == mx, cand_i, IBIG),
                      axis=1, keepdims=True)                         # lowest-index tie-break
        new_v = jnp.where(lane == j, mx, new_v)
        new_i = jnp.where(lane == j, sel, new_i)
        cand_v = jnp.where(cand_i == sel, NEG, cand_v)
    topv_s[...] = new_v
    topi_s[...] = new_i

    # ---- last tile: finalize softmax, add beam scores, merge per batch ------
    @pl.when(vi == nv - 1)
    def _finalize():
        bsz = vals_ref.shape[0]
        lse = m_s[...] + jnp.log(l_s[...])                           # (rows, 1)
        scores = cum_ref[...] + topv_s[...] - lse                    # (rows, 128)
        row = jax.lax.broadcasted_iota(jnp.int32, scores.shape, 0)
        out_lane = jax.lax.broadcasted_iota(jnp.int32, (bsz, LANE), 1)
        out_row = jax.lax.broadcasted_iota(jnp.int32, (bsz, LANE), 0)
        out_v = jnp.full((bsz, LANE), NEG, jnp.float32)
        out_i = jnp.zeros((bsz, LANE), jnp.int32)
        for b in range(bsz):                                         # static, last tile only
            in_batch = (row >= b * kin) & (row < (b + 1) * kin)
            sb = jnp.where(in_batch, scores, NEG)
            # flattened id = local_beam * V_pad + token (no in-kernel div/mod)
            fb = jnp.where(in_batch, (row - b * kin) * v_pad + topi_s[...], IBIG)
            for j in range(k_out):
                mx = jnp.max(jnp.max(sb, axis=1, keepdims=True),
                             axis=0, keepdims=True)                  # (1,1)
                sel = jnp.min(jnp.min(jnp.where(sb == mx, fb, IBIG),
                                      axis=1, keepdims=True),
                              axis=0, keepdims=True)                 # (1,1)
                hit = (out_row == b) & (out_lane == j)
                out_v = jnp.where(hit, mx, out_v)
                out_i = jnp.where(hit, sel, out_i)
                sb = jnp.where(fb == sel, NEG, sb)
        vals_ref[...] = out_v
        ids_ref[...] = out_i


# ---------------------------------------------------------------------------
# Host-side wrappers
# ---------------------------------------------------------------------------
def prepare_weights(w, b, *, tv_cap=2048):
    """Cast W to bf16 and pad the vocab axis to a multiple of the V-tile.

    tv_cap: V-tile width.  W tile is double-buffered: 2 x (H*tv*2B + tv*4B)
    must stay under the scoped-VMEM limit; tv_cap=2048 is safe up to H~2048
    with the 32 MiB limit set below (lower tv_cap for larger H).  Padded bias
    columns are ~-inf so they never win the softmax / top-k.
    """
    H, V = w.shape
    v128 = ((V + LANE - 1) // LANE) * LANE
    tv = min(tv_cap, v128)
    v_pad = ((V + tv - 1) // tv) * tv
    w_pad = jnp.zeros((H, v_pad), jnp.bfloat16).at[:, :V].set(w.astype(jnp.bfloat16))
    b_pad = jnp.full((1, v_pad), NEG, jnp.float32).at[:, :V].set(b.astype(jnp.float32))
    return w_pad, b_pad, v_pad, tv


def fused_step(x, cum, w_pad, b_pad, k_out, v_pad, tv):
    """x: (B, kin, H) bf16 decoder input; cum: (B, kin) f32 cumulative log-ps.
    Returns (vals (B,k) f32, src_beam (B,k) i32, token (B,k) i32)."""
    B, kin, H = x.shape
    assert k_out <= LANE
    rows = B * kin
    nv = v_pad // tv
    x2 = x.reshape(rows, H)
    cum2 = cum.reshape(rows, 1)
    kern = functools.partial(fused_step_kernel, k_out=k_out, kin=kin, v_pad=v_pad)
    vals, ids = pl.pallas_call(
        kern,
        out_shape=(jax.ShapeDtypeStruct((B, LANE), jnp.float32),
                   jax.ShapeDtypeStruct((B, LANE), jnp.int32)),
        grid=(nv,),
        in_specs=[
            pl.BlockSpec((rows, H), lambda vi: (0, 0)),    # x: resident across V tiles
            pl.BlockSpec((rows, 1), lambda vi: (0, 0)),    # cumulative log-ps: resident
            pl.BlockSpec((H, tv), lambda vi: (0, vi)),     # streamed W tile (once total)
            pl.BlockSpec((1, tv), lambda vi: (0, vi)),     # bias tile
        ],
        out_specs=(
            pl.BlockSpec((B, LANE), lambda vi: (0, 0)),
            pl.BlockSpec((B, LANE), lambda vi: (0, 0)),
        ),
        scratch_shapes=[
            pltpu.VMEM((rows, 1), jnp.float32),      # running max
            pltpu.VMEM((rows, 1), jnp.float32),      # running sum(exp)
            pltpu.VMEM((rows, LANE), jnp.float32),   # per-row top-k logits
            pltpu.VMEM((rows, LANE), jnp.int32),     # per-row top-k vocab ids
        ],
        compiler_params=pltpu.CompilerParams(
            dimension_semantics=("arbitrary",),      # vocab axis is a reduction
            vmem_limit_bytes=32 * 1024 * 1024,
        ),
    )(x2, cum2, w_pad, b_pad)
    vals_k = vals[:, :k_out]
    ids_k = ids[:, :k_out]
    return vals_k, ids_k // v_pad, ids_k % v_pad


# ---------------------------------------------------------------------------
# Beam-search driver (mirrors ASRBeamSearchBase usage); whole decode under jit
# ---------------------------------------------------------------------------
@functools.partial(jax.jit,
                   static_argnames=("beam_size", "sos_id", "eos_id", "pad_id", "n_steps"))
def asr_beam_search(hidden, embed, w, b, *, beam_size, sos_id, eos_id, pad_id,
                    n_steps=3):
    B, H = hidden.shape
    k = beam_size
    w_pad, b_pad, v_pad, tv = prepare_weights(w, b)

    # step 0: decode from <sos>.  The _inflate kernel + host transpose are
    # replaced by broadcasting hidden across beams right here (XLA fuses it).
    sos_tok = jnp.full((B, 1), sos_id, jnp.int32)
    x0 = (embed[sos_tok] + hidden[:, None, :]).astype(jnp.bfloat16)        # (B, 1, H)
    cum0 = jnp.zeros((B, 1), jnp.float32)
    vals, _, tok = fused_step(x0, cum0, w_pad, b_pad, k, v_pad, tv)
    cumulative_ps = vals                                                    # (B, k)
    ongoing = jnp.concatenate(
        [jnp.full((B, k, 1), sos_id, jnp.int32), tok[:, :, None]], axis=-1)

    # main beam loop
    for _ in range(n_steps):
        last = ongoing[:, :, -1]                                            # (B, k)
        # TODO(synk): embedding gather could be folded into the kernel via
        # PrefetchScalarGridSpec + pl.Element row gather; kept as XLA glue here.
        x = (embed[last] + hidden[:, None, :]).astype(jnp.bfloat16)         # (B, k, H)
        vals, src_beam, tok = fused_step(x, cumulative_ps, w_pad, b_pad, k, v_pad, tv)
        ongoing = jnp.take_along_axis(ongoing, src_beam[:, :, None], axis=1)
        ongoing = jnp.concatenate([ongoing, tok[:, :, None]], axis=-1)
        cumulative_ps = vals
        # TODO(synk): _get_successor's recursive eos handling and the
        # self.finished / self.finished_ps Python-list bookkeeping are
        # host-side data-dependent control flow; not translated.

    # _get_hypothesis (no-finished-beams branch), no per-batch host sync
    top_beam = jnp.argmax(cumulative_ps, axis=1)
    preds = jnp.take_along_axis(ongoing, top_beam[:, None, None], axis=1)[:, 0, :]
    # _fill_sequence is a no-op here: all hypotheses share the same length,
    # so there is nothing to pad with pad_id.
    return preds, cumulative_ps


# ---------------------------------------------------------------------------
# Pure-JAX reference for the fused step (for correctness check)
# ---------------------------------------------------------------------------
def fused_step_reference(x, cum, w, b, k_out):
    B, kin, H = x.shape
    V = w.shape[1]
    logits = jnp.einsum("bkh,hv->bkv", x, w,
                        preferred_element_type=jnp.float32) + b
    scores = cum[:, :, None] + jax.nn.log_softmax(logits, axis=-1)
    vals, ids = jax.lax.top_k(scores.reshape(B, kin * V), k_out)
    return vals, ids // V, ids % V, scores


# ---------------------------------------------------------------------------
if __name__ == "__main__":
    B, H, V = 2, 32, 32
    beam_size = 3
    sos_id, eos_id, pad_id = 1, 2, 0

    key = jax.random.PRNGKey(0)
    k_hidden, k_embed, k_w, k_b, k_tok, k_cum = jax.random.split(key, 6)
    hidden = jax.random.normal(k_hidden, (B, H), jnp.float32)
    embed = jax.random.normal(k_embed, (V, H), jnp.float32) * 0.1
    w = jax.random.normal(k_w, (H, V), jnp.float32) * 0.1
    b = jax.random.normal(k_b, (1, V), jnp.float32) * 0.01

    # full beam search (fused Pallas kernel called once per decode step)
    preds, cum_ps = asr_beam_search(
        hidden, embed, w, b,
        beam_size=beam_size, sos_id=sos_id, eos_id=eos_id, pad_id=pad_id,
        n_steps=3)
    jax.block_until_ready((preds, cum_ps))

    # correctness check of one fused step against the pure-JAX reference
    toks = jax.random.randint(k_tok, (B, beam_size), 0, V)
    cum_t = jax.random.normal(k_cum, (B, beam_size), jnp.float32)
    x_t = (embed[toks] + hidden[:, None, :]).astype(jnp.bfloat16)
    w_pad, b_pad, v_pad, tv = prepare_weights(w, b)
    vals_k, beam_k, tok_k = fused_step(x_t, cum_t, w_pad, b_pad,
                                       beam_size, v_pad, tv)
    vals_r, _, _, scores_r = fused_step_reference(
        x_t, cum_t, w.astype(jnp.bfloat16), b, beam_size)
    picked = scores_r[jnp.arange(B)[:, None], beam_k, tok_k]
    assert np.allclose(np.asarray(vals_k), np.asarray(vals_r),
                       atol=2e-3, rtol=2e-3)
    assert np.allclose(np.asarray(picked), np.asarray(vals_k),
                       atol=2e-3, rtol=2e-3)

    print("KERNEL_OK")
</pallas_src>

<mosaic_0001>
module attributes {stable_mosaic.version = 11 : i64} {
  func.func @fused_step_kernel(%arg0: i32, %arg1: memref<2x32xbf16, #tpu.memory_space<vmem>>, %arg2: memref<2x1xf32, #tpu.memory_space<vmem>>, %arg3: memref<32x128xbf16, #tpu.memory_space<vmem>>, %arg4: memref<1x128xf32, #tpu.memory_space<vmem>>, %arg5: memref<2x128xf32, #tpu.memory_space<vmem>>, %arg6: memref<2x128xi32, #tpu.memory_space<vmem>>, %arg7: memref<2x1xf32, #tpu.memory_space<vmem>>, %arg8: memref<2x1xf32, #tpu.memory_space<vmem>>, %arg9: memref<2x128xf32, #tpu.memory_space<vmem>>, %arg10: memref<2x128xi32, #tpu.memory_space<vmem>>) attributes {dimension_semantics = [#tpu.dimension_semantics<arbitrary>], iteration_bounds = array<i64: 1>, scalar_prefetch = 0 : i64, scratch_operands = 4 : i64, tpu.core_type = #tpu.core_type<tc>, window_params = [{pipeline_mode = #tpu.pipeline_mode<synchronous>, transform_indices = @transform_0, window_bounds = array<i64: 2, 32>}, {pipeline_mode = #tpu.pipeline_mode<synchronous>, transform_indices = @transform_1, window_bounds = array<i64: 2, 1>}, {transform_indices = @transform_2, window_bounds = array<i64: 32, 128>}, {transform_indices = @transform_3, window_bounds = array<i64: 1, 128>}, {pipeline_mode = #tpu.pipeline_mode<synchronous>, transform_indices = @transform_4, window_bounds = array<i64: 2, 128>}, {pipeline_mode = #tpu.pipeline_mode<synchronous>, transform_indices = @transform_5, window_bounds = array<i64: 2, 128>}]} {
    %c0_i32 = arith.constant 0 : i32
    %0 = arith.cmpi eq, %arg0, %c0_i32 : i32
    %1 = arith.extui %0 : i1 to i32
    %c0_i32_0 = arith.constant 0 : i32
    %2 = arith.cmpi ne, %1, %c0_i32_0 : i32
    scf.if %2 {
      %cst_42 = arith.constant -1.000000e+30 : f32
      %103 = vector.broadcast %cst_42 : f32 to vector<2x1xf32>
      %c0_43 = arith.constant 0 : index
      %c0_44 = arith.constant 0 : index
      %104 = vector.load %arg7[%c0_43, %c0_44] : memref<2x1xf32, #tpu.memory_space<vmem>>, vector<2x1xf32>
      tpu.vector_store %arg7[%c0_43, %c0_44], %103 {strides = array<i32>} : memref<2x1xf32, #tpu.memory_space<vmem>>, vector<2x1xf32>,
      %cst_45 = arith.constant 0.000000e+00 : f32
      %105 = vector.broadcast %cst_45 : f32 to vector<2x1xf32>
      %c0_46 = arith.constant 0 : index
      %c0_47 = arith.constant 0 : index
      %106 = vector.load %arg8[%c0_46, %c0_47] : memref<2x1xf32, #tpu.memory_space<vmem>>, vector<2x1xf32>
      tpu.vector_store %arg8[%c0_46, %c0_47], %105 {strides = array<i32>} : memref<2x1xf32, #tpu.memory_space<vmem>>, vector<2x1xf32>,
      %cst_48 = arith.constant -1.000000e+30 : f32
      %107 = vector.broadcast %cst_48 : f32 to vector<2x128xf32>
      %c0_49 = arith.constant 0 : index
      %c0_50 = arith.constant 0 : index
      %108 = vector.load %arg9[%c0_49, %c0_50] : memref<2x128xf32, #tpu.memory_space<vmem>>, vector<2x128xf32>
      tpu.vector_store %arg9[%c0_49, %c0_50], %107 {strides = array<i32>} : memref<2x128xf32, #tpu.memory_space<vmem>>, vector<2x128xf32>,
      %c0_i32_51 = arith.constant 0 : i32
      %109 = vector.broadcast %c0_i32_51 : i32 to vector<2x128xi32>
      %c0_52 = arith.constant 0 : index
      %c0_53 = arith.constant 0 : index
      %110 = vector.load %arg10[%c0_52, %c0_53] : memref<2x128xi32, #tpu.memory_space<vmem>>, vector<2x128xi32>
      tpu.vector_store %arg10[%c0_52, %c0_53], %109 {strides = array<i32>} : memref<2x128xi32, #tpu.memory_space<vmem>>, vector<2x128xi32>,
    } else {
    }
    %c0 = arith.constant 0 : index
    %c0_1 = arith.constant 0 : index
    %3 = vector.load %arg1[%c0, %c0_1] : memref<2x32xbf16, #tpu.memory_space<vmem>>, vector<2x32xbf16>
    %c0_2 = arith.constant 0 : index
    %c0_3 = arith.constant 0 : index
    %4 = vector.load %arg3[%c0_2, %c0_3] : memref<32x128xbf16, #tpu.memory_space<vmem>>, vector<32x128xbf16>
    %cst = arith.constant dense<0.000000e+00> : vector<2x128xf32>
    %5 = tpu.matmul %3, %4, %cst {dimension_numbers = #tpu.dot_dimension_numbers<[1], [0], [0], [1], [0, 0, 1, 1], [], []>} : vector<2x32xbf16>, vector<32x128xbf16>, vector<2x128xf32> -> vector<2x128xf32>
    %c0_4 = arith.constant 0 : index
    %c0_5 = arith.constant 0 : index
    %6 = vector.load %arg4[%c0_4, %c0_5] : memref<1x128xf32, #tpu.memory_space<vmem>>, vector<1x128xf32>
    %7 = vector.broadcast %6 : vector<1x128xf32> to vector<2x128xf32>
    %8 = arith.addf %5, %7 : vector<2x128xf32>
    %c0_6 = arith.constant 0 : index
    %c0_7 = arith.constant 0 : index
    %9 = vector.load %arg7[%c0_6, %c0_7] : memref<2x1xf32, #tpu.memory_space<vmem>>, vector<2x1xf32>
    %cst_8 = arith.constant dense<0xFF800000> : vector<2xf32>
    %10 = vector.multi_reduction <maximumf>, %8, %cst_8 [1] : vector<2x128xf32> to vector<2xf32>
    %11 = vector.shape_cast %10 : vector<2xf32> to vector<2x1xf32>
    %12 = arith.maximumf %9, %11 : vector<2x1xf32>
    %c0_9 = arith.constant 0 : index
    %c0_10 = arith.constant 0 : index
    %13 = vector.load %arg8[%c0_9, %c0_10] : memref<2x1xf32, #tpu.memory_space<vmem>>, vector<2x1xf32>
    %14 = arith.subf %9, %12 : vector<2x1xf32>
    %15 = math.exp %14 : vector<2x1xf32>
    %16 = arith.mulf %13, %15 : vector<2x1xf32>
    %17 = vector.broadcast %12 : vector<2x1xf32> to vector<2x128xf32>
    %18 = arith.subf %8, %17 : vector<2x128xf32>
    %19 = math.exp %18 : vector<2x128xf32>
    %cst_11 = arith.constant dense<0.000000e+00> : vector<2xf32>
    %20 = vector.multi_reduction <add>, %19, %cst_11 [1] : vector<2x128xf32> to vector<2xf32>
    %21 = vector.shape_cast %20 : vector<2xf32> to vector<2x1xf32>
    %22 = arith.addf %16, %21 : vector<2x1xf32>
    %c0_12 = arith.constant 0 : index
    %c0_13 = arith.constant 0 : index
    %23 = vector.load %arg8[%c0_12, %c0_13] : memref<2x1xf32, #tpu.memory_space<vmem>>, vector<2x1xf32>
    tpu.vector_store %arg8[%c0_12, %c0_13], %22 {strides = array<i32>} : memref<2x1xf32, #tpu.memory_space<vmem>>, vector<2x1xf32>,
    %c0_14 = arith.constant 0 : index
    %c0_15 = arith.constant 0 : index
    %24 = vector.load %arg7[%c0_14, %c0_15] : memref<2x1xf32, #tpu.memory_space<vmem>>, vector<2x1xf32>
    tpu.vector_store %arg7[%c0_14, %c0_15], %12 {strides = array<i32>} : memref<2x1xf32, #tpu.memory_space<vmem>>, vector<2x1xf32>,
    %c128_i32 = arith.constant 128 : i32
    %25 = arith.muli %arg0, %c128_i32 : i32
    %26 = tpu.iota {dimensions = array<i32: 1>} : vector<2x128xi32>
    %27 = vector.broadcast %25 : i32 to vector<2x128xi32>
    %28 = arith.addi %27, %26 : vector<2x128xi32>
    %c0_16 = arith.constant 0 : index
    %c0_17 = arith.constant 0 : index
    %29 = vector.load %arg9[%c0_16, %c0_17] : memref<2x128xf32, #tpu.memory_space<vmem>>, vector<2x128xf32>
    %30 = tpu.concatenate %29, %8 in 1 : vector<2x128xf32>, vector<2x128xf32> -> vector<2x256xf32>
    %c0_18 = arith.constant 0 : index
    %c0_19 = arith.constant 0 : index
    %31 = vector.load %arg10[%c0_18, %c0_19] : memref<2x128xi32, #tpu.memory_space<vmem>>, vector<2x128xi32>
    %32 = tpu.concatenate %31, %28 in 1 : vector<2x128xi32>, vector<2x128xi32> -> vector<2x256xi32>
    %33 = tpu.iota {dimensions = array<i32: 1>} : vector<2x128xi32>
    %cst_20 = arith.constant -1.000000e+30 : f32
    %34 = vector.broadcast %cst_20 : f32 to vector<2x128xf32>
    %c0_i32_21 = arith.constant 0 : i32
    %35 = vector.broadcast %c0_i32_21 : i32 to vector<2x128xi32>
    %cst_22 = arith.constant dense<0xFF800000> : vector<2xf32>
    %36 = vector.multi_reduction <maximumf>, %30, %cst_22 [1] : vector<2x256xf32> to vector<2xf32>
    %37 = vector.shape_cast %36 : vector<2xf32> to vector<2x1xf32>
    %38 = vector.broadcast %37 : vector<2x1xf32> to vector<2x256xf32>
    %39 = arith.cmpf oeq, %30, %38 : vector<2x256xf32>
    %c2147483647_i32 = arith.constant 2147483647 : i32
    %40 = vector.broadcast %c2147483647_i32 : i32 to vector<2x256xi32>
    %41 = arith.select %39, %32, %40 : vector<2x256xi1>, vector<2x256xi32>
    %cst_23 = arith.constant dense<2147483647> : vector<2xi32>
    %42 = vector.multi_reduction <minsi>, %41, %cst_23 [1] : vector<2x256xi32> to vector<2xi32>
    %43 = vector.shape_cast %42 : vector<2xi32> to vector<2x1xi32>
    %c0_i32_24 = arith.constant 0 : i32
    %44 = vector.broadcast %c0_i32_24 : i32 to vector<2x128xi32>
    %45 = arith.cmpi eq, %33, %44 : vector<2x128xi32>
    %46 = vector.shape_cast %37 : vector<2x1xf32> to vector<2x1xf32>
    %47 = vector.broadcast %46 : vector<2x1xf32> to vector<2x128xf32>
    %48 = arith.select %45, %47, %34 : vector<2x128xi1>, vector<2x128xf32>
    %c0_i32_25 = arith.constant 0 : i32
    %49 = vector.broadcast %c0_i32_25 : i32 to vector<2x128xi32>
    %50 = arith.cmpi eq, %33, %49 : vector<2x128xi32>
    %51 = vector.shape_cast %43 : vector<2x1xi32> to vector<2x1xi32>
    %52 = vector.broadcast %51 : vector<2x1xi32> to vector<2x128xi32>
    %53 = arith.select %50, %52, %35 : vector<2x128xi1>, vector<2x128xi32>
    %54 = vector.broadcast %43 : vector<2x1xi32> to vector<2x256xi32>
    %55 = arith.cmpi eq, %32, %54 : vector<2x256xi32>
    %cst_26 = arith.constant -1.000000e+30 : f32
    %56 = vector.broadcast %cst_26 : f32 to vector<2x256xf32>
    %57 = arith.select %55, %56, %30 : vector<2x256xi1>, vector<2x256xf32>
    %cst_27 = arith.constant dense<0xFF800000> : vector<2xf32>
    %58 = vector.multi_reduction <maximumf>, %57, %cst_27 [1] : vector<2x256xf32> to vector<2xf32>
    %59 = vector.shape_cast %58 : vector<2xf32> to vector<2x1xf32>
    %60 = vector.broadcast %59 : vector<2x1xf32> to vector<2x256xf32>
    %61 = arith.cmpf oeq, %57, %60 : vector<2x256xf32>
    %c2147483647_i32_28 = arith.constant 2147483647 : i32
    %62 = vector.broadcast %c2147483647_i32_28 : i32 to vector<2x256xi32>
    %63 = arith.select %61, %32, %62 : vector<2x256xi1>, vector<2x256xi32>
    %cst_29 = arith.constant dense<2147483647> : vector<2xi32>
    %64 = vector.multi_reduction <minsi>, %63, %cst_29 [1] : vector<2x256xi32> to vector<2xi32>
    %65 = vector.shape_cast %64 : vector<2xi32> to vector<2x1xi32>
    %c1_i32 = arith.constant 1 : i32
    %66 = vector.broadcast %c1_i32 : i32 to vector<2x128xi32>
    %67 = arith.cmpi eq, %33, %66 : vector<2x128xi32>
    %68 = vector.shape_cast %59 : vector<2x1xf32> to vector<2x1xf32>
    %69 = vector.broadcast %68 : vector<2x1xf32> to vector<2x128xf32>
    %70 = arith.select %67, %69, %48 : vector<2x128xi1>, vector<2x128xf32>
    %c1_i32_30 = arith.constant 1 : i32
    %71 = vector.broadcast %c1_i32_30 : i32 to vector<2x128xi32>
    %72 = arith.cmpi eq, %33, %71 : vector<2x128xi32>
    %73 = vector.shape_cast %65 : vector<2x1xi32> to vector<2x1xi32>
    %74 = vector.broadcast %73 : vector<2x1xi32> to vector<2x128xi32>
    %75 = arith.select %72, %74, %53 : vector<2x128xi1>, vector<2x128xi32>
    %76 = vector.broadcast %65 : vector<2x1xi32> to vector<2x256xi32>
    %77 = arith.cmpi eq, %32, %76 : vector<2x256xi32>
    %cst_31 = arith.constant -1.000000e+30 : f32
    %78 = vector.broadcast %cst_31 : f32 to vector<2x256xf32>
    %79 = arith.select %77, %78, %57 : vector<2x256xi1>, vector<2x256xf32>
    %cst_32 = arith.constant dense<0xFF800000> : vector<2xf32>
    %80 = vector.multi_reduction <maximumf>, %79, %cst_32 [1] : vector<2x256xf32> to vector<2xf32>
    %81 = vector.shape_cast %80 : vector<2xf32> to vector<2x1xf32>
    %82 = vector.broadcast %81 : vector<2x1xf32> to vector<2x256xf32>
    %83 = arith.cmpf oeq, %79, %82 : vector<2x256xf32>
    %c2147483647_i32_33 = arith.constant 2147483647 : i32
    %84 = vector.broadcast %c2147483647_i32_33 : i32 to vector<2x256xi32>
    %85 = arith.select %83, %32, %84 : vector<2x256xi1>, vector<2x256xi32>
    %cst_34 = arith.constant dense<2147483647> : vector<2xi32>
    %86 = vector.multi_reduction <minsi>, %85, %cst_34 [1] : vector<2x256xi32> to vector<2xi32>
    %87 = vector.shape_cast %86 : vector<2xi32> to vector<2x1xi32>
    %c2_i32 = arith.constant 2 : i32
    %88 = vector.broadcast %c2_i32 : i32 to vector<2x128xi32>
    %89 = arith.cmpi eq, %33, %88 : vector<2x128xi32>
    %90 = vector.shape_cast %81 : vector<2x1xf32> to vector<2x1xf32>
    %91 = vector.broadcast %90 : vector<2x1xf32> to vector<2x128xf32>
    %92 = arith.select %89, %91, %70 : vector<2x128xi1>, vector<2x128xf32>
    %c2_i32_35 = arith.constant 2 : i32
    %93 = vector.broadcast %c2_i32_35 : i32 to vector<2x128xi32>
    %94 = arith.cmpi eq, %33, %93 : vector<2x128xi32>
    %95 = vector.shape_cast %87 : vector<2x1xi32> to vector<2x1xi32>
    %96 = vector.broadcast %95 : vector<2x1xi32> to vector<2x128xi32>
    %97 = arith.select %94, %96, %75 : vector<2x128xi1>, vector<2x128xi32>
    %c0_36 = arith.constant 0 : index
    %c0_37 = arith.constant 0 : index
    %98 = vector.load %arg9[%c0_36, %c0_37] : memref<2x128xf32, #tpu.memory_space<vmem>>, vector<2x128xf32>
    tpu.vector_store %arg9[%c0_36, %c0_37], %92 {strides = array<i32>} : memref<2x128xf32, #tpu.memory_space<vmem>>, vector<2x128xf32>,
    %c0_38 = arith.constant 0 : index
    %c0_39 = arith.constant 0 : index
    %99 = vector.load %arg10[%c0_38, %c0_39] : memref<2x128xi32, #tpu.memory_space<vmem>>, vector<2x128xi32>
    tpu.vector_store %arg10[%c0_38, %c0_39], %97 {strides = array<i32>} : memref<2x128xi32, #tpu.memory_space<vmem>>, vector<2x128xi32>,
    %c0_i32_40 = arith.constant 0 : i32
    %100 = arith.cmpi eq, %arg0, %c0_i32_40 : i32
    %101 = arith.extui %100 : i1 to i32
    %c0_i32_41 = arith.constant 0 : i32
    %102 = arith.cmpi ne, %101, %c0_i32_41 : i32
    scf.if %102 {
      %c0_42 = arith.constant 0 : index
      %c0_43 = arith.constant 0 : index
      %103 = vector.load %arg7[%c0_42, %c0_43] : memref<2x1xf32, #tpu.memory_space<vmem>>, vector<2x1xf32>
      %c0_44 = arith.constant 0 : index
      %c0_45 = arith.constant 0 : index
      %104 = vector.load %arg8[%c0_44, %c0_45] : memref<2x1xf32, #tpu.memory_space<vmem>>, vector<2x1xf32>
      %105 = math.log %104 : vector<2x1xf32>
      %106 = arith.addf %103, %105 : vector<2x1xf32>
      %c0_46 = arith.constant 0 : index
      %c0_47 = arith.constant 0 : index
      %107 = vector.load %arg2[%c0_46, %c0_47] : memref<2x1xf32, #tpu.memory_space<vmem>>, vector<2x1xf32>
      %c0_48 = arith.constant 0 : index
      %c0_49 = arith.constant 0 : index
      %108 = vector.load %arg9[%c0_48, %c0_49] : memref<2x128xf32, #tpu.memory_space<vmem>>, vector<2x128xf32>
      %109 = vector.broadcast %107 : vector<2x1xf32> to vector<2x128xf32>
      %110 = arith.addf %109, %108 : vector<2x128xf32>
      %111 = vector.broadcast %106 : vector<2x1xf32> to vector<2x128xf32>
      %112 = arith.subf %110, %111 : vector<2x128xf32>
      %113 = tpu.iota {dimensions = array<i32: 0>} : vector<2x128xi32>
      %114 = tpu.iota {dimensions = array<i32: 1>} : vector<2x128xi32>
      %115 = tpu.iota {dimensions = array<i32: 0>} : vector<2x128xi32>
      %cst_50 = arith.constant -1.000000e+30 : f32
      %116 = vector.broadcast %cst_50 : f32 to vector<2x128xf32>
      %c0_i32_51 = arith.constant 0 : i32
      %117 = vector.broadcast %c0_i32_51 : i32 to vector<2x128xi32>
      %c0_i32_52 = arith.constant 0 : i32
      %118 = vector.broadcast %c0_i32_52 : i32 to vector<2x128xi32>
      %119 = arith.cmpi sge, %113, %118 : vector<2x128xi32>
      %c1_i32_53 = arith.constant 1 : i32
      %120 = vector.broadcast %c1_i32_53 : i32 to vector<2x128xi32>
      %121 = arith.cmpi slt, %113, %120 : vector<2x128xi32>
      %122 = arith.andi %119, %121 : vector<2x128xi1>
      %cst_54 = arith.constant -1.000000e+30 : f32
      %123 = vector.broadcast %cst_54 : f32 to vector<2x128xf32>
      %124 = arith.select %122, %112, %123 : vector<2x128xi1>, vector<2x128xf32>
      %c0_i32_55 = arith.constant 0 : i32
      %125 = vector.broadcast %c0_i32_55 : i32 to vector<2x128xi32>
      %126 = arith.subi %113, %125 : vector<2x128xi32>
      %c128_i32_56 = arith.constant 128 : i32
      %127 = vector.broadcast %c128_i32_56 : i32 to vector<2x128xi32>
      %128 = arith.muli %126, %127 : vector<2x128xi32>
      %c0_57 = arith.constant 0 : index
      %c0_58 = arith.constant 0 : index
      %129 = vector.load %arg10[%c0_57, %c0_58] : memref<2x128xi32, #tpu.memory_space<vmem>>, vector<2x128xi32>
      %130 = arith.addi %128, %129 : vector<2x128xi32>
      %c2147483647_i32_59 = arith.constant 2147483647 : i32
      %131 = vector.broadcast %c2147483647_i32_59 : i32 to vector<2x128xi32>
      %132 = arith.select %122, %130, %131 : vector<2x128xi1>, vector<2x128xi32>
      %cst_60 = arith.constant dense<0xFF800000> : vector<2xf32>
      %133 = vector.multi_reduction <maximumf>, %124, %cst_60 [1] : vector<2x128xf32> to vector<2xf32>
      %134 = vector.shape_cast %133 : vector<2xf32> to vector<2x1xf32>
      %cst_61 = arith.constant dense<0xFF800000> : vector<1xf32>
      %135 = vector.multi_reduction <maximumf>, %134, %cst_61 [0] : vector<2x1xf32> to vector<1xf32>
      %136 = vector.shape_cast %135 : vector<1xf32> to vector<1x1xf32>
      %137 = vector.broadcast %136 : vector<1x1xf32> to vector<2x128xf32>
      %138 = arith.cmpf oeq, %124, %137 : vector<2x128xf32>
      %c2147483647_i32_62 = arith.constant 2147483647 : i32
      %139 = vector.broadcast %c2147483647_i32_62 : i32 to vector<2x128xi32>
      %140 = arith.select %138, %132, %139 : vector<2x128xi1>, vector<2x128xi32>
      %cst_63 = arith.constant dense<2147483647> : vector<2xi32>
      %141 = vector.multi_reduction <minsi>, %140, %cst_63 [1] : vector<2x128xi32> to vector<2xi32>
      %142 = vector.shape_cast %141 : vector<2xi32> to vector<2x1xi32>
      %cst_64 = arith.constant dense<2147483647> : vector<1xi32>
      %143 = vector.multi_reduction <minsi>, %142, %cst_64 [0] : vector<2x1xi32> to vector<1xi32>
      %144 = vector.shape_cast %143 : vector<1xi32> to vector<1x1xi32>
      %c0_i32_65 = arith.constant 0 : i32
      %145 = vector.broadcast %c0_i32_65 : i32 to vector<2x128xi32>
      %146 = arith.cmpi eq, %115, %145 : vector<2x128xi32>
      %c0_i32_66 = arith.constant 0 : i32
      %147 = vector.broadcast %c0_i32_66 : i32 to vector<2x128xi32>
      %148 = arith.cmpi eq, %114, %147 : vector<2x128xi32>
      %149 = arith.andi %146, %148 : vector<2x128xi1>
      %150 = vector.shape_cast %136 : vector<1x1xf32> to vector<1x1xf32>
      %151 = vector.broadcast %150 : vector<1x1xf32> to vector<2x128xf32>
      %152 = arith.select %149, %151, %116 : vector<2x128xi1>, vector<2x128xf32>
      %153 = vector.shape_cast %144 : vector<1x1xi32> to vector<1x1xi32>
      %154 = vector.broadcast %153 : vector<1x1xi32> to vector<2x128xi32>
      %155 = arith.select %149, %154, %117 : vector<2x128xi1>, vector<2x128xi32>
      %156 = vector.broadcast %144 : vector<1x1xi32> to vector<2x128xi32>
      %157 = arith.cmpi eq, %132, %156 : vector<2x128xi32>
      %cst_67 = arith.constant -1.000000e+30 : f32
      %158 = vector.broadcast %cst_67 : f32 to vector<2x128xf32>
      %159 = arith.select %157, %158, %124 : vector<2x128xi1>, vector<2x128xf32>
      %cst_68 = arith.constant dense<0xFF800000> : vector<2xf32>
      %160 = vector.multi_reduction <maximumf>, %159, %cst_68 [1] : vector<2x128xf32> to vector<2xf32>
      %161 = vector.shape_cast %160 : vector<2xf32> to vector<2x1xf32>
      %cst_69 = arith.constant dense<0xFF800000> : vector<1xf32>
      %162 = vector.multi_reduction <maximumf>, %161, %cst_69 [0] : vector<2x1xf32> to vector<1xf32>
      %163 = vector.shape_cast %162 : vector<1xf32> to vector<1x1xf32>
      %164 = vector.broadcast %163 : vector<1x1xf32> to vector<2x128xf32>
      %165 = arith.cmpf oeq, %159, %164 : vector<2x128xf32>
      %c2147483647_i32_70 = arith.constant 2147483647 : i32
      %166 = vector.broadcast %c2147483647_i32_70 : i32 to vector<2x128xi32>
      %167 = arith.select %165, %132, %166 : vector<2x128xi1>, vector<2x128xi32>
      %cst_71 = arith.constant dense<2147483647> : vector<2xi32>
      %168 = vector.multi_reduction <minsi>, %167, %cst_71 [1] : vector<2x128xi32> to vector<2xi32>
      %169 = vector.shape_cast %168 : vector<2xi32> to vector<2x1xi32>
      %cst_72 = arith.constant dense<2147483647> : vector<1xi32>
      %170 = vector.multi_reduction <minsi>, %169, %cst_72 [0] : vector<2x1xi32> to vector<1xi32>
      %171 = vector.shape_cast %170 : vector<1xi32> to vector<1x1xi32>
      %c0_i32_73 = arith.constant 0 : i32
      %172 = vector.broadcast %c0_i32_73 : i32 to vector<2x128xi32>
      %173 = arith.cmpi eq, %115, %172 : vector<2x128xi32>
      %c1_i32_74 = arith.constant 1 : i32
      %174 = vector.broadcast %c1_i32_74 : i32 to vector<2x128xi32>
      %175 = arith.cmpi eq, %114, %174 : vector<2x128xi32>
      %176 = arith.andi %173, %175 : vector<2x128xi1>
      %177 = vector.shape_cast %163 : vector<1x1xf32> to vector<1x1xf32>
      %178 = vector.broadcast %177 : vector<1x1xf32> to vector<2x128xf32>
      %179 = arith.select %176, %178, %152 : vector<2x128xi1>, vector<2x128xf32>
      %180 = vector.shape_cast %171 : vector<1x1xi32> to vector<1x1xi32>
      %181 = vector.broadcast %180 : vector<1x1xi32> to vector<2x128xi32>
      %182 = arith.select %176, %181, %155 : vector<2x128xi1>, vector<2x128xi32>
      %183 = vector.broadcast %171 : vector<1x1xi32> to vector<2x128xi32>
      %184 = arith.cmpi eq, %132, %183 : vector<2x128xi32>
      %cst_75 = arith.constant -1.000000e+30 : f32
      %185 = vector.broadcast %cst_75 : f32 to vector<2x128xf32>
      %186 = arith.select %184, %185, %159 : vector<2x128xi1>, vector<2x128xf32>
      %cst_76 = arith.constant dense<0xFF800000> : vector<2xf32>
      %187 = vector.multi_reduction <maximumf>, %186, %cst_76 [1] : vector<2x128xf32> to vector<2xf32>
      %188 = vector.shape_cast %187 : vector<2xf32> to vector<2x1xf32>
      %cst_77 = arith.constant dense<0xFF800000> : vector<1xf32>
      %189 = vector.multi_reduction <maximumf>, %188, %cst_77 [0] : vector<2x1xf32> to vector<1xf32>
      %190 = vector.shape_cast %189 : vector<1xf32> to vector<1x1xf32>
      %191 = vector.broadcast %190 : vector<1x1xf32> to vector<2x128xf32>
      %192 = arith.cmpf oeq, %186, %191 : vector<2x128xf32>
      %c2147483647_i32_78 = arith.constant 2147483647 : i32
      %193 = vector.broadcast %c2147483647_i32_78 : i32 to vector<2x128xi32>
      %194 = arith.select %192, %132, %193 : vector<2x128xi1>, vector<2x128xi32>
      %cst_79 = arith.constant dense<2147483647> : vector<2xi32>
      %195 = vector.multi_reduction <minsi>, %194, %cst_79 [1] : vector<2x128xi32> to vector<2xi32>
      %196 = vector.shape_cast %195 : vector<2xi32> to vector<2x1xi32>
      %cst_80 = arith.constant dense<2147483647> : vector<1xi32>
      %197 = vector.multi_reduction <minsi>, %196, %cst_80 [0] : vector<2x1xi32> to vector<1xi32>
      %198 = vector.shape_cast %197 : vector<1xi32> to vector<1x1xi32>
      %c0_i32_81 = arith.constant 0 : i32
      %199 = vector.broadcast %c0_i32_81 : i32 to vector<2x128xi32>
      %200 = arith.cmpi eq, %115, %199 : vector<2x128xi32>
      %c2_i32_82 = arith.constant 2 : i32
      %201 = vector.broadcast %c2_i32_82 : i32 to vector<2x128xi32>
      %202 = arith.cmpi eq, %114, %201 : vector<2x128xi32>
      %203 = arith.andi %200, %202 : vector<2x128xi1>
      %204 = vector.shape_cast %190 : vector<1x1xf32> to vector<1x1xf32>
      %205 = vector.broadcast %204 : vector<1x1xf32> to vector<2x128xf32>
      %206 = arith.select %203, %205, %179 : vector<2x128xi1>, vector<2x128xf32>
      %207 = vector.shape_cast %198 : vector<1x1xi32> to vector<1x1xi32>
      %208 = vector.broadcast %207 : vector<1x1xi32> to vector<2x128xi32>
      %209 = arith.select %203, %208, %182 : vector<2x128xi1>, vector<2x128xi32>
      %c1_i32_83 = arith.constant 1 : i32
      %210 = vector.broadcast %c1_i32_83 : i32 to vector<2x128xi32>
      %211 = arith.cmpi sge, %113, %210 : vector<2x128xi32>
      %c2_i32_84 = arith.constant 2 : i32
      %212 = vector.broadcast %c2_i32_84 : i32 to vector<2x128xi32>
      %213 = arith.cmpi slt, %113, %212 : vector<2x128xi32>
      %214 = arith.andi %211, %213 : vector<2x128xi1>
      %cst_85 = arith.constant -1.000000e+30 : f32
      %215 = vector.broadcast %cst_85 : f32 to vector<2x128xf32>
      %216 = arith.select %214, %112, %215 : vector<2x128xi1>, vector<2x128xf32>
      %c1_i32_86 = arith.constant 1 : i32
      %217 = vector.broadcast %c1_i32_86 : i32 to vector<2x128xi32>
      %218 = arith.subi %113, %217 : vector<2x128xi32>
      %c128_i32_87 = arith.constant 128 : i32
      %219 = vector.broadcast %c128_i32_87 : i32 to vector<2x128xi32>
      %220 = arith.muli %218, %219 : vector<2x128xi32>
      %c0_88 = arith.constant 0 : index
      %c0_89 = arith.constant 0 : index
      %221 = vector.load %arg10[%c0_88, %c0_89] : memref<2x128xi32, #tpu.memory_space<vmem>>, vector<2x128xi32>
      %222 = arith.addi %220, %221 : vector<2x128xi32>
      %c2147483647_i32_90 = arith.constant 2147483647 : i32
      %223 = vector.broadcast %c2147483647_i32_90 : i32 to vector<2x128xi32>
      %224 = arith.select %214, %222, %223 : vector<2x128xi1>, vector<2x128xi32>
      %cst_91 = arith.constant dense<0xFF800000> : vector<2xf32>
      %225 = vector.multi_reduction <maximumf>, %216, %cst_91 [1] : vector<2x128xf32> to vector<2xf32>
      %226 = vector.shape_cast %225 : vector<2xf32> to vector<2x1xf32>
      %cst_92 = arith.constant dense<0xFF800000> : vector<1xf32>
      %227 = vector.multi_reduction <maximumf>, %226, %cst_92 [0] : vector<2x1xf32> to vector<1xf32>
      %228 = vector.shape_cast %227 : vector<1xf32> to vector<1x1xf32>
      %229 = vector.broadcast %228 : vector<1x1xf32> to vector<2x128xf32>
      %230 = arith.cmpf oeq, %216, %229 : vector<2x128xf32>
      %c2147483647_i32_93 = arith.constant 2147483647 : i32
      %231 = vector.broadcast %c2147483647_i32_93 : i32 to vector<2x128xi32>
      %232 = arith.select %230, %224, %231 : vector<2x128xi1>, vector<2x128xi32>
      %cst_94 = arith.constant dense<2147483647> : vector<2xi32>
      %233 = vector.multi_reduction <minsi>, %232, %cst_94 [1] : vector<2x128xi32> to vector<2xi32>
      %234 = vector.shape_cast %233 : vector<2xi32> to vector<2x1xi32>
      %cst_95 = arith.constant dense<2147483647> : vector<1xi32>
      %235 = vector.multi_reduction <minsi>, %234, %cst_95 [0] : vector<2x1xi32> to vector<1xi32>
      %236 = vector.shape_cast %235 : vector<1xi32> to vector<1x1xi32>
      %c1_i32_96 = arith.constant 1 : i32
      %237 = vector.broadcast %c1_i32_96 : i32 to vector<2x128xi32>
      %238 = arith.cmpi eq, %115, %237 : vector<2x128xi32>
      %c0_i32_97 = arith.constant 0 : i32
      %239 = vector.broadcast %c0_i32_97 : i32 to vector<2x128xi32>
      %240 = arith.cmpi eq, %114, %239 : vector<2x128xi32>
      %241 = arith.andi %238, %240 : vector<2x128xi1>
      %242 = vector.shape_cast %228 : vector<1x1xf32> to vector<1x1xf32>
      %243 = vector.broadcast %242 : vector<1x1xf32> to vector<2x128xf32>
      %244 = arith.select %241, %243, %206 : vector<2x128xi1>, vector<2x128xf32>
      %245 = vector.shape_cast %236 : vector<1x1xi32> to vector<1x1xi32>
      %246 = vector.broadcast %245 : vector<1x1xi32> to vector<2x128xi32>
      %247 = arith.select %241, %246, %209 : vector<2x128xi1>, vector<2x128xi32>
      %248 = vector.broadcast %236 : vector<1x1xi32> to vector<2x128xi32>
      %249 = arith.cmpi eq, %224, %248 : vector<2x128xi32>
      %cst_98 = arith.constant -1.000000e+30 : f32
      %250 = vector.broadcast %cst_98 : f32 to vector<2x128xf32>
      %251 = arith.select %249, %250, %216 : vector<2x128xi1>, vector<2x128xf32>
      %cst_99 = arith.constant dense<0xFF800000> : vector<2xf32>
      %252 = vector.multi_reduction <maximumf>, %251, %cst_99 [1] : vector<2x128xf32> to vector<2xf32>
      %253 = vector.shape_cast %252 : vector<2xf32> to vector<2x1xf32>
      %cst_100 = arith.constant dense<0xFF800000> : vector<1xf32>
      %254 = vector.multi_reduction <maximumf>, %253, %cst_100 [0] : vector<2x1xf32> to vector<1xf32>
      %255 = vector.shape_cast %254 : vector<1xf32> to vector<1x1xf32>
      %256 = vector.broadcast %255 : vector<1x1xf32> to vector<2x128xf32>
      %257 = arith.cmpf oeq, %251, %256 : vector<2x128xf32>
      %c2147483647_i32_101 = arith.constant 2147483647 : i32
      %258 = vector.broadcast %c2147483647_i32_101 : i32 to vector<2x128xi32>
      %259 = arith.select %257, %224, %258 : vector<2x128xi1>, vector<2x128xi32>
      %cst_102 = arith.constant dense<2147483647> : vector<2xi32>
      %260 = vector.multi_reduction <minsi>, %259, %cst_102 [1] : vector<2x128xi32> to vector<2xi32>
      %261 = vector.shape_cast %260 : vector<2xi32> to vector<2x1xi32>
      %cst_103 = arith.constant dense<2147483647> : vector<1xi32>
      %262 = vector.multi_reduction <minsi>, %261, %cst_103 [0] : vector<2x1xi32> to vector<1xi32>
      %263 = vector.shape_cast %262 : vector<1xi32> to vector<1x1xi32>
      %c1_i32_104 = arith.constant 1 : i32
      %264 = vector.broadcast %c1_i32_104 : i32 to vector<2x128xi32>
      %265 = arith.cmpi eq, %115, %264 : vector<2x128xi32>
      %c1_i32_105 = arith.constant 1 : i32
      %266 = vector.broadcast %c1_i32_105 : i32 to vector<2x128xi32>
      %267 = arith.cmpi eq, %114, %266 : vector<2x128xi32>
      %268 = arith.andi %265, %267 : vector<2x128xi1>
      %269 = vector.shape_cast %255 : vector<1x1xf32> to vector<1x1xf32>
      %270 = vector.broadcast %269 : vector<1x1xf32> to vector<2x128xf32>
      %271 = arith.select %268, %270, %244 : vector<2x128xi1>, vector<2x128xf32>
      %272 = vector.shape_cast %263 : vector<1x1xi32> to vector<1x1xi32>
      %273 = vector.broadcast %272 : vector<1x1xi32> to vector<2x128xi32>
      %274 = arith.select %268, %273, %247 : vector<2x128xi1>, vector<2x128xi32>
      %275 = vector.broadcast %263 : vector<1x1xi32> to vector<2x128xi32>
      %276 = arith.cmpi eq, %224, %275 : vector<2x128xi32>
      %cst_106 = arith.constant -1.000000e+30 : f32
      %277 = vector.broadcast %cst_106 : f32 to vector<2x128xf32>
      %278 = arith.select %276, %277, %251 : vector<2x128xi1>, vector<2x128xf32>
      %cst_107 = arith.constant dense<0xFF800000> : vector<2xf32>
      %279 = vector.multi_reduction <maximumf>, %278, %cst_107 [1] : vector<2x128xf32> to vector<2xf32>
      %280 = vector.shape_cast %279 : vector<2xf32> to vector<2x1xf32>
      %cst_108 = arith.constant dense<0xFF800000> : vector<1xf32>
      %281 = vector.multi_reduction <maximumf>, %280, %cst_108 [0] : vector<2x1xf32> to vector<1xf32>
      %282 = vector.shape_cast %281 : vector<1xf32> to vector<1x1xf32>
      %283 = vector.broadcast %282 : vector<1x1xf32> to vector<2x128xf32>
      %284 = arith.cmpf oeq, %278, %283 : vector<2x128xf32>
      %c2147483647_i32_109 = arith.constant 2147483647 : i32
      %285 = vector.broadcast %c2147483647_i32_109 : i32 to vector<2x128xi32>
      %286 = arith.select %284, %224, %285 : vector<2x128xi1>, vector<2x128xi32>
      %cst_110 = arith.constant dense<2147483647> : vector<2xi32>
      %287 = vector.multi_reduction <minsi>, %286, %cst_110 [1] : vector<2x128xi32> to vector<2xi32>
      %288 = vector.shape_cast %287 : vector<2xi32> to vector<2x1xi32>
      %cst_111 = arith.constant dense<2147483647> : vector<1xi32>
      %289 = vector.multi_reduction <minsi>, %288, %cst_111 [0] : vector<2x1xi32> to vector<1xi32>
      %290 = vector.shape_cast %289 : vector<1xi32> to vector<1x1xi32>
      %c1_i32_112 = arith.constant 1 : i32
      %291 = vector.broadcast %c1_i32_112 : i32 to vector<2x128xi32>
      %292 = arith.cmpi eq, %115, %291 : vector<2x128xi32>
      %c2_i32_113 = arith.constant 2 : i32
      %293 = vector.broadcast %c2_i32_113 : i32 to vector<2x128xi32>
      %294 = arith.cmpi eq, %114, %293 : vector<2x128xi32>
      %295 = arith.andi %292, %294 : vector<2x128xi1>
      %296 = vector.shape_cast %282 : vector<1x1xf32> to vector<1x1xf32>
      %297 = vector.broadcast %296 : vector<1x1xf32> to vector<2x128xf32>
      %298 = arith.select %295, %297, %271 : vector<2x128xi1>, vector<2x128xf32>
      %299 = vector.shape_cast %290 : vector<1x1xi32> to vector<1x1xi32>
      %300 = vector.broadcast %299 : vector<1x1xi32> to vector<2x128xi32>
      %301 = arith.select %295, %300, %274 : vector<2x128xi1>, vector<2x128xi32>
      %c0_114 = arith.constant 0 : index
      %c0_115 = arith.constant 0 : index
      %302 = vector.load %arg5[%c0_114, %c0_115] : memref<2x128xf32, #tpu.memory_space<vmem>>, vector<2x128xf32>
      tpu.vector_store %arg5[%c0_114, %c0_115], %298 {strides = array<i32>} : memref<2x128xf32, #tpu.memory_space<vmem>>, vector<2x128xf32>,
      %c0_116 = arith.constant 0 : index
      %c0_117 = arith.constant 0 : index
      %303 = vector.load %arg6[%c0_116, %c0_117] : memref<2x128xi32, #tpu.memory_space<vmem>>, vector<2x128xi32>
      tpu.vector_store %arg6[%c0_116, %c0_117], %301 {strides = array<i32>} : memref<2x128xi32, #tpu.memory_space<vmem>>, vector<2x128xi32>,
    } else {
    }
    return
  }
  func.func @transform_0(%arg0: i32) -> (i32, i32) {
    %c0_i32 = arith.constant 0 : i32
    %c0_i32_0 = arith.constant 0 : i32
    %c0_i32_1 = arith.constant 0 : i32
    return %c0_i32, %c0_i32_0 : i32, i32
  }
  func.func @transform_1(%arg0: i32) -> (i32, i32) {
    %c0_i32 = arith.constant 0 : i32
    %c0_i32_0 = arith.constant 0 : i32
    %c0_i32_1 = arith.constant 0 : i32
    return %c0_i32, %c0_i32_0 : i32, i32
  }
  func.func @transform_2(%arg0: i32) -> (i32, i32) {
    %c0_i32 = arith.constant 0 : i32
    %c0_i32_0 = arith.constant 0 : i32
    return %c0_i32, %arg0 : i32, i32
  }
  func.func @transform_3(%arg0: i32) -> (i32, i32) {
    %c0_i32 = arith.constant 0 : i32
    %c0_i32_0 = arith.constant 0 : i32
    return %c0_i32, %arg0 : i32, i32
  }
  func.func @transform_4(%arg0: i32) -> (i32, i32) {
    %c0_i32 = arith.constant 0 : i32
    %c0_i32_0 = arith.constant 0 : i32
    %c0_i32_1 = arith.constant 0 : i32
    return %c0_i32, %c0_i32_0 : i32, i32
  }
  func.func @transform_5(%arg0: i32) -> (i32, i32) {
    %c0_i32 = arith.constant 0 : i32
    %c0_i32_0 = arith.constant 0 : i32
    %c0_i32_1 = arith.constant 0 : i32
    return %c0_i32, %c0_i32_0 : i32, i32
  }
}

module attributes {stable_mosaic.version = 11 : i64} {
  func.func @fused_step_kernel(%arg0: i32, %arg1: memref<6x32xbf16, #tpu.memory_space<vmem>>, %arg2: memref<6x1xf32, #tpu.memory_space<vmem>>, %arg3: memref<32x128xbf16, #tpu.memory_space<vmem>>, %arg4: memref<1x128xf32, #tpu.memory_space<vmem>>, %arg5: memref<2x128xf32, #tpu.memory_space<vmem>>, %arg6: memref<2x128xi32, #tpu.memory_space<vmem>>, %arg7: memref<6x1xf32, #tpu.memory_space<vmem>>, %arg8: memref<6x1xf32, #tpu.memory_space<vmem>>, %arg9: memref<6x128xf32, #tpu.memory_space<vmem>>, %arg10: memref<6x128xi32, #tpu.memory_space<vmem>>) attributes {dimension_semantics = [#tpu.dimension_semantics<arbitrary>], iteration_bounds = array<i64: 1>, scalar_prefetch = 0 : i64, scratch_operands = 4 : i64, tpu.core_type = #tpu.core_type<tc>, window_params = [{pipeline_mode = #tpu.pipeline_mode<synchronous>, transform_indices = @transform_0, window_bounds = array<i64: 6, 32>}, {pipeline_mode = #tpu.pipeline_mode<synchronous>, transform_indices = @transform_1, window_bounds = array<i64: 6, 1>}, {transform_indices = @transform_2, window_bounds = array<i64: 32, 128>}, {transform_indices = @transform_3, window_bounds = array<i64: 1, 128>}, {pipeline_mode = #tpu.pipeline_mode<synchronous>, transform_indices = @transform_4, window_bounds = array<i64: 2, 128>}, {pipeline_mode = #tpu.pipeline_mode<synchronous>, transform_indices = @transform_5, window_bounds = array<i64: 2, 128>}]} {
    %c0_i32 = arith.constant 0 : i32
    %0 = arith.cmpi eq, %arg0, %c0_i32 : i32
    %1 = arith.extui %0 : i1 to i32
    %c0_i32_0 = arith.constant 0 : i32
    %2 = arith.cmpi ne, %1, %c0_i32_0 : i32
    scf.if %2 {
      %cst_42 = arith.constant -1.000000e+30 : f32
      %103 = vector.broadcast %cst_42 : f32 to vector<6x1xf32>
      %c0_43 = arith.constant 0 : index
      %c0_44 = arith.constant 0 : index
      %104 = vector.load %arg7[%c0_43, %c0_44] : memref<6x1xf32, #tpu.memory_space<vmem>>, vector<6x1xf32>
      tpu.vector_store %arg7[%c0_43, %c0_44], %103 {strides = array<i32>} : memref<6x1xf32, #tpu.memory_space<vmem>>, vector<6x1xf32>,
      %cst_45 = arith.constant 0.000000e+00 : f32
      %105 = vector.broadcast %cst_45 : f32 to vector<6x1xf32>
      %c0_46 = arith.constant 0 : index
      %c0_47 = arith.constant 0 : index
      %106 = vector.load %arg8[%c0_46, %c0_47] : memref<6x1xf32, #tpu.memory_space<vmem>>, vector<6x1xf32>
      tpu.vector_store %arg8[%c0_46, %c0_47], %105 {strides = array<i32>} : memref<6x1xf32, #tpu.memory_space<vmem>>, vector<6x1xf32>,
      %cst_48 = arith.constant -1.000000e+30 : f32
      %107 = vector.broadcast %cst_48 : f32 to vector<6x128xf32>
      %c0_49 = arith.constant 0 : index
      %c0_50 = arith.constant 0 : index
      %108 = vector.load %arg9[%c0_49, %c0_50] : memref<6x128xf32, #tpu.memory_space<vmem>>, vector<6x128xf32>
      tpu.vector_store %arg9[%c0_49, %c0_50], %107 {strides = array<i32>} : memref<6x128xf32, #tpu.memory_space<vmem>>, vector<6x128xf32>,
      %c0_i32_51 = arith.constant 0 : i32
      %109 = vector.broadcast %c0_i32_51 : i32 to vector<6x128xi32>
      %c0_52 = arith.constant 0 : index
      %c0_53 = arith.constant 0 : index
      %110 = vector.load %arg10[%c0_52, %c0_53] : memref<6x128xi32, #tpu.memory_space<vmem>>, vector<6x128xi32>
      tpu.vector_store %arg10[%c0_52, %c0_53], %109 {strides = array<i32>} : memref<6x128xi32, #tpu.memory_space<vmem>>, vector<6x128xi32>,
    } else {
    }
    %c0 = arith.constant 0 : index
    %c0_1 = arith.constant 0 : index
    %3 = vector.load %arg1[%c0, %c0_1] : memref<6x32xbf16, #tpu.memory_space<vmem>>, vector<6x32xbf16>
    %c0_2 = arith.constant 0 : index
    %c0_3 = arith.constant 0 : index
    %4 = vector.load %arg3[%c0_2, %c0_3] : memref<32x128xbf16, #tpu.memory_space<vmem>>, vector<32x128xbf16>
    %cst = arith.constant dense<0.000000e+00> : vector<6x128xf32>
    %5 = tpu.matmul %3, %4, %cst {dimension_numbers = #tpu.dot_dimension_numbers<[1], [0], [0], [1], [0, 0, 1, 1], [], []>} : vector<6x32xbf16>, vector<32x128xbf16>, vector<6x128xf32> -> vector<6x128xf32>
    %c0_4 = arith.constant 0 : index
    %c0_5 = arith.constant 0 : index
    %6 = vector.load %arg4[%c0_4, %c0_5] : memref<1x128xf32, #tpu.memory_space<vmem>>, vector<1x128xf32>
    %7 = vector.broadcast %6 : vector<1x128xf32> to vector<6x128xf32>
    %8 = arith.addf %5, %7 : vector<6x128xf32>
    %c0_6 = arith.constant 0 : index
    %c0_7 = arith.constant 0 : index
    %9 = vector.load %arg7[%c0_6, %c0_7] : memref<6x1xf32, #tpu.memory_space<vmem>>, vector<6x1xf32>
    %cst_8 = arith.constant dense<0xFF800000> : vector<6xf32>
    %10 = vector.multi_reduction <maximumf>, %8, %cst_8 [1] : vector<6x128xf32> to vector<6xf32>
    %11 = vector.shape_cast %10 : vector<6xf32> to vector<6x1xf32>
    %12 = arith.maximumf %9, %11 : vector<6x1xf32>
    %c0_9 = arith.constant 0 : index
    %c0_10 = arith.constant 0 : index
    %13 = vector.load %arg8[%c0_9, %c0_10] : memref<6x1xf32, #tpu.memory_space<vmem>>, vector<6x1xf32>
    %14 = arith.subf %9, %12 : vector<6x1xf32>
    %15 = math.exp %14 : vector<6x1xf32>
    %16 = arith.mulf %13, %15 : vector<6x1xf32>
    %17 = vector.broadcast %12 : vector<6x1xf32> to vector<6x128xf32>
    %18 = arith.subf %8, %17 : vector<6x128xf32>
    %19 = math.exp %18 : vector<6x128xf32>
    %cst_11 = arith.constant dense<0.000000e+00> : vector<6xf32>
    %20 = vector.multi_reduction <add>, %19, %cst_11 [1] : vector<6x128xf32> to vector<6xf32>
    %21 = vector.shape_cast %20 : vector<6xf32> to vector<6x1xf32>
    %22 = arith.addf %16, %21 : vector<6x1xf32>
    %c0_12 = arith.constant 0 : index
    %c0_13 = arith.constant 0 : index
    %23 = vector.load %arg8[%c0_12, %c0_13] : memref<6x1xf32, #tpu.memory_space<vmem>>, vector<6x1xf32>
    tpu.vector_store %arg8[%c0_12, %c0_13], %22 {strides = array<i32>} : memref<6x1xf32, #tpu.memory_space<vmem>>, vector<6x1xf32>,
    %c0_14 = arith.constant 0 : index
    %c0_15 = arith.constant 0 : index
    %24 = vector.load %arg7[%c0_14, %c0_15] : memref<6x1xf32, #tpu.memory_space<vmem>>, vector<6x1xf32>
    tpu.vector_store %arg7[%c0_14, %c0_15], %12 {strides = array<i32>} : memref<6x1xf32, #tpu.memory_space<vmem>>, vector<6x1xf32>,
    %c128_i32 = arith.constant 128 : i32
    %25 = arith.muli %arg0, %c128_i32 : i32
    %26 = tpu.iota {dimensions = array<i32: 1>} : vector<6x128xi32>
    %27 = vector.broadcast %25 : i32 to vector<6x128xi32>
    %28 = arith.addi %27, %26 : vector<6x128xi32>
    %c0_16 = arith.constant 0 : index
    %c0_17 = arith.constant 0 : index
    %29 = vector.load %arg9[%c0_16, %c0_17] : memref<6x128xf32, #tpu.memory_space<vmem>>, vector<6x128xf32>
    %30 = tpu.concatenate %29, %8 in 1 : vector<6x128xf32>, vector<6x128xf32> -> vector<6x256xf32>
    %c0_18 = arith.constant 0 : index
    %c0_19 = arith.constant 0 : index
    %31 = vector.load %arg10[%c0_18, %c0_19] : memref<6x128xi32, #tpu.memory_space<vmem>>, vector<6x128xi32>
    %32 = tpu.concatenate %31, %28 in 1 : vector<6x128xi32>, vector<6x128xi32> -> vector<6x256xi32>
    %33 = tpu.iota {dimensions = array<i32: 1>} : vector<6x128xi32>
    %cst_20 = arith.constant -1.000000e+30 : f32
    %34 = vector.broadcast %cst_20 : f32 to vector<6x128xf32>
    %c0_i32_21 = arith.constant 0 : i32
    %35 = vector.broadcast %c0_i32_21 : i32 to vector<6x128xi32>
    %cst_22 = arith.constant dense<0xFF800000> : vector<6xf32>
    %36 = vector.multi_reduction <maximumf>, %30, %cst_22 [1] : vector<6x256xf32> to vector<6xf32>
    %37 = vector.shape_cast %36 : vector<6xf32> to vector<6x1xf32>
    %38 = vector.broadcast %37 : vector<6x1xf32> to vector<6x256xf32>
    %39 = arith.cmpf oeq, %30, %38 : vector<6x256xf32>
    %c2147483647_i32 = arith.constant 2147483647 : i32
    %40 = vector.broadcast %c2147483647_i32 : i32 to vector<6x256xi32>
    %41 = arith.select %39, %32, %40 : vector<6x256xi1>, vector<6x256xi32>
    %cst_23 = arith.constant dense<2147483647> : vector<6xi32>
    %42 = vector.multi_reduction <minsi>, %41, %cst_23 [1] : vector<6x256xi32> to vector<6xi32>
    %43 = vector.shape_cast %42 : vector<6xi32> to vector<6x1xi32>
    %c0_i32_24 = arith.constant 0 : i32
    %44 = vector.broadcast %c0_i32_24 : i32 to vector<6x128xi32>
    %45 = arith.cmpi eq, %33, %44 : vector<6x128xi32>
    %46 = vector.shape_cast %37 : vector<6x1xf32> to vector<6x1xf32>
    %47 = vector.broadcast %46 : vector<6x1xf32> to vector<6x128xf32>
    %48 = arith.select %45, %47, %34 : vector<6x128xi1>, vector<6x128xf32>
    %c0_i32_25 = arith.constant 0 : i32
    %49 = vector.broadcast %c0_i32_25 : i32 to vector<6x128xi32>
    %50 = arith.cmpi eq, %33, %49 : vector<6x128xi32>
    %51 = vector.shape_cast %43 : vector<6x1xi32> to vector<6x1xi32>
    %52 = vector.broadcast %51 : vector<6x1xi32> to vector<6x128xi32>
    %53 = arith.select %50, %52, %35 : vector<6x128xi1>, vector<6x128xi32>
    %54 = vector.broadcast %43 : vector<6x1xi32> to vector<6x256xi32>
    %55 = arith.cmpi eq, %32, %54 : vector<6x256xi32>
    %cst_26 = arith.constant -1.000000e+30 : f32
    %56 = vector.broadcast %cst_26 : f32 to vector<6x256xf32>
    %57 = arith.select %55, %56, %30 : vector<6x256xi1>, vector<6x256xf32>
    %cst_27 = arith.constant dense<0xFF800000> : vector<6xf32>
    %58 = vector.multi_reduction <maximumf>, %57, %cst_27 [1] : vector<6x256xf32> to vector<6xf32>
    %59 = vector.shape_cast %58 : vector<6xf32> to vector<6x1xf32>
    %60 = vector.broadcast %59 : vector<6x1xf32> to vector<6x256xf32>
    %61 = arith.cmpf oeq, %57, %60 : vector<6x256xf32>
    %c2147483647_i32_28 = arith.constant 2147483647 : i32
    %62 = vector.broadcast %c2147483647_i32_28 : i32 to vector<6x256xi32>
    %63 = arith.select %61, %32, %62 : vector<6x256xi1>, vector<6x256xi32>
    %cst_29 = arith.constant dense<2147483647> : vector<6xi32>
    %64 = vector.multi_reduction <minsi>, %63, %cst_29 [1] : vector<6x256xi32> to vector<6xi32>
    %65 = vector.shape_cast %64 : vector<6xi32> to vector<6x1xi32>
    %c1_i32 = arith.constant 1 : i32
    %66 = vector.broadcast %c1_i32 : i32 to vector<6x128xi32>
    %67 = arith.cmpi eq, %33, %66 : vector<6x128xi32>
    %68 = vector.shape_cast %59 : vector<6x1xf32> to vector<6x1xf32>
    %69 = vector.broadcast %68 : vector<6x1xf32> to vector<6x128xf32>
    %70 = arith.select %67, %69, %48 : vector<6x128xi1>, vector<6x128xf32>
    %c1_i32_30 = arith.constant 1 : i32
    %71 = vector.broadcast %c1_i32_30 : i32 to vector<6x128xi32>
    %72 = arith.cmpi eq, %33, %71 : vector<6x128xi32>
    %73 = vector.shape_cast %65 : vector<6x1xi32> to vector<6x1xi32>
    %74 = vector.broadcast %73 : vector<6x1xi32> to vector<6x128xi32>
    %75 = arith.select %72, %74, %53 : vector<6x128xi1>, vector<6x128xi32>
    %76 = vector.broadcast %65 : vector<6x1xi32> to vector<6x256xi32>
    %77 = arith.cmpi eq, %32, %76 : vector<6x256xi32>
    %cst_31 = arith.constant -1.000000e+30 : f32
    %78 = vector.broadcast %cst_31 : f32 to vector<6x256xf32>
    %79 = arith.select %77, %78, %57 : vector<6x256xi1>, vector<6x256xf32>
    %cst_32 = arith.constant dense<0xFF800000> : vector<6xf32>
    %80 = vector.multi_reduction <maximumf>, %79, %cst_32 [1] : vector<6x256xf32> to vector<6xf32>
    %81 = vector.shape_cast %80 : vector<6xf32> to vector<6x1xf32>
    %82 = vector.broadcast %81 : vector<6x1xf32> to vector<6x256xf32>
    %83 = arith.cmpf oeq, %79, %82 : vector<6x256xf32>
    %c2147483647_i32_33 = arith.constant 2147483647 : i32
    %84 = vector.broadcast %c2147483647_i32_33 : i32 to vector<6x256xi32>
    %85 = arith.select %83, %32, %84 : vector<6x256xi1>, vector<6x256xi32>
    %cst_34 = arith.constant dense<2147483647> : vector<6xi32>
    %86 = vector.multi_reduction <minsi>, %85, %cst_34 [1] : vector<6x256xi32> to vector<6xi32>
    %87 = vector.shape_cast %86 : vector<6xi32> to vector<6x1xi32>
    %c2_i32 = arith.constant 2 : i32
    %88 = vector.broadcast %c2_i32 : i32 to vector<6x128xi32>
    %89 = arith.cmpi eq, %33, %88 : vector<6x128xi32>
    %90 = vector.shape_cast %81 : vector<6x1xf32> to vector<6x1xf32>
    %91 = vector.broadcast %90 : vector<6x1xf32> to vector<6x128xf32>
    %92 = arith.select %89, %91, %70 : vector<6x128xi1>, vector<6x128xf32>
    %c2_i32_35 = arith.constant 2 : i32
    %93 = vector.broadcast %c2_i32_35 : i32 to vector<6x128xi32>
    %94 = arith.cmpi eq, %33, %93 : vector<6x128xi32>
    %95 = vector.shape_cast %87 : vector<6x1xi32> to vector<6x1xi32>
    %96 = vector.broadcast %95 : vector<6x1xi32> to vector<6x128xi32>
    %97 = arith.select %94, %96, %75 : vector<6x128xi1>, vector<6x128xi32>
    %c0_36 = arith.constant 0 : index
    %c0_37 = arith.constant 0 : index
    %98 = vector.load %arg9[%c0_36, %c0_37] : memref<6x128xf32, #tpu.memory_space<vmem>>, vector<6x128xf32>
    tpu.vector_store %arg9[%c0_36, %c0_37], %92 {strides = array<i32>} : memref<6x128xf32, #tpu.memory_space<vmem>>, vector<6x128xf32>,
    %c0_38 = arith.constant 0 : index
    %c0_39 = arith.constant 0 : index
    %99 = vector.load %arg10[%c0_38, %c0_39] : memref<6x128xi32, #tpu.memory_space<vmem>>, vector<6x128xi32>
    tpu.vector_store %arg10[%c0_38, %c0_39], %97 {strides = array<i32>} : memref<6x128xi32, #tpu.memory_space<vmem>>, vector<6x128xi32>,
    %c0_i32_40 = arith.constant 0 : i32
    %100 = arith.cmpi eq, %arg0, %c0_i32_40 : i32
    %101 = arith.extui %100 : i1 to i32
    %c0_i32_41 = arith.constant 0 : i32
    %102 = arith.cmpi ne, %101, %c0_i32_41 : i32
    scf.if %102 {
      %c0_42 = arith.constant 0 : index
      %c0_43 = arith.constant 0 : index
      %103 = vector.load %arg7[%c0_42, %c0_43] : memref<6x1xf32, #tpu.memory_space<vmem>>, vector<6x1xf32>
      %c0_44 = arith.constant 0 : index
      %c0_45 = arith.constant 0 : index
      %104 = vector.load %arg8[%c0_44, %c0_45] : memref<6x1xf32, #tpu.memory_space<vmem>>, vector<6x1xf32>
      %105 = math.log %104 : vector<6x1xf32>
      %106 = arith.addf %103, %105 : vector<6x1xf32>
      %c0_46 = arith.constant 0 : index
      %c0_47 = arith.constant 0 : index
      %107 = vector.load %arg2[%c0_46, %c0_47] : memref<6x1xf32, #tpu.memory_space<vmem>>, vector<6x1xf32>
      %c0_48 = arith.constant 0 : index
      %c0_49 = arith.constant 0 : index
      %108 = vector.load %arg9[%c0_48, %c0_49] : memref<6x128xf32, #tpu.memory_space<vmem>>, vector<6x128xf32>
      %109 = vector.broadcast %107 : vector<6x1xf32> to vector<6x128xf32>
      %110 = arith.addf %109, %108 : vector<6x128xf32>
      %111 = vector.broadcast %106 : vector<6x1xf32> to vector<6x128xf32>
      %112 = arith.subf %110, %111 : vector<6x128xf32>
      %113 = tpu.iota {dimensions = array<i32: 0>} : vector<6x128xi32>
      %114 = tpu.iota {dimensions = array<i32: 1>} : vector<2x128xi32>
      %115 = tpu.iota {dimensions = array<i32: 0>} : vector<2x128xi32>
      %cst_50 = arith.constant -1.000000e+30 : f32
      %116 = vector.broadcast %cst_50 : f32 to vector<2x128xf32>
      %c0_i32_51 = arith.constant 0 : i32
      %117 = vector.broadcast %c0_i32_51 : i32 to vector<2x128xi32>
      %c0_i32_52 = arith.constant 0 : i32
      %118 = vector.broadcast %c0_i32_52 : i32 to vector<6x128xi32>
      %119 = arith.cmpi sge, %113, %118 : vector<6x128xi32>
      %c3_i32 = arith.constant 3 : i32
      %120 = vector.broadcast %c3_i32 : i32 to vector<6x128xi32>
      %121 = arith.cmpi slt, %113, %120 : vector<6x128xi32>
      %122 = arith.andi %119, %121 : vector<6x128xi1>
      %cst_53 = arith.constant -1.000000e+30 : f32
      %123 = vector.broadcast %cst_53 : f32 to vector<6x128xf32>
      %124 = arith.select %122, %112, %123 : vector<6x128xi1>, vector<6x128xf32>
      %c0_i32_54 = arith.constant 0 : i32
      %125 = vector.broadcast %c0_i32_54 : i32 to vector<6x128xi32>
      %126 = arith.subi %113, %125 : vector<6x128xi32>
      %c128_i32_55 = arith.constant 128 : i32
      %127 = vector.broadcast %c128_i32_55 : i32 to vector<6x128xi32>
      %128 = arith.muli %126, %127 : vector<6x128xi32>
      %c0_56 = arith.constant 0 : index
      %c0_57 = arith.constant 0 : index
      %129 = vector.load %arg10[%c0_56, %c0_57] : memref<6x128xi32, #tpu.memory_space<vmem>>, vector<6x128xi32>
      %130 = arith.addi %128, %129 : vector<6x128xi32>
      %c2147483647_i32_58 = arith.constant 2147483647 : i32
      %131 = vector.broadcast %c2147483647_i32_58 : i32 to vector<6x128xi32>
      %132 = arith.select %122, %130, %131 : vector<6x128xi1>, vector<6x128xi32>
      %cst_59 = arith.constant dense<0xFF800000> : vector<6xf32>
      %133 = vector.multi_reduction <maximumf>, %124, %cst_59 [1] : vector<6x128xf32> to vector<6xf32>
      %134 = vector.shape_cast %133 : vector<6xf32> to vector<6x1xf32>
      %cst_60 = arith.constant dense<0xFF800000> : vector<1xf32>
      %135 = vector.multi_reduction <maximumf>, %134, %cst_60 [0] : vector<6x1xf32> to vector<1xf32>
      %136 = vector.shape_cast %135 : vector<1xf32> to vector<1x1xf32>
      %137 = vector.broadcast %136 : vector<1x1xf32> to vector<6x128xf32>
      %138 = arith.cmpf oeq, %124, %137 : vector<6x128xf32>
      %c2147483647_i32_61 = arith.constant 2147483647 : i32
      %139 = vector.broadcast %c2147483647_i32_61 : i32 to vector<6x128xi32>
      %140 = arith.select %138, %132, %139 : vector<6x128xi1>, vector<6x128xi32>
      %cst_62 = arith.constant dense<2147483647> : vector<6xi32>
      %141 = vector.multi_reduction <minsi>, %140, %cst_62 [1] : vector<6x128xi32> to vector<6xi32>
      %142 = vector.shape_cast %141 : vector<6xi32> to vector<6x1xi32>
      %cst_63 = arith.constant dense<2147483647> : vector<1xi32>
      %143 = vector.multi_reduction <minsi>, %142, %cst_63 [0] : vector<6x1xi32> to vector<1xi32>
      %144 = vector.shape_cast %143 : vector<1xi32> to vector<1x1xi32>
      %c0_i32_64 = arith.constant 0 : i32
      %145 = vector.broadcast %c0_i32_64 : i32 to vector<2x128xi32>
      %146 = arith.cmpi eq, %115, %145 : vector<2x128xi32>
      %c0_i32_65 = arith.constant 0 : i32
      %147 = vector.broadcast %c0_i32_65 : i32 to vector<2x128xi32>
      %148 = arith.cmpi eq, %114, %147 : vector<2x128xi32>
      %149 = arith.andi %146, %148 : vector<2x128xi1>
      %150 = vector.shape_cast %136 : vector<1x1xf32> to vector<1x1xf32>
      %151 = vector.broadcast %150 : vector<1x1xf32> to vector<2x128xf32>
      %152 = arith.select %149, %151, %116 : vector<2x128xi1>, vector<2x128xf32>
      %153 = vector.shape_cast %144 : vector<1x1xi32> to vector<1x1xi32>
      %154 = vector.broadcast %153 : vector<1x1xi32> to vector<2x128xi32>
      %155 = arith.select %149, %154, %117 : vector<2x128xi1>, vector<2x128xi32>
      %156 = vector.broadcast %144 : vector<1x1xi32> to vector<6x128xi32>
      %157 = arith.cmpi eq, %132, %156 : vector<6x128xi32>
      %cst_66 = arith.constant -1.000000e+30 : f32
      %158 = vector.broadcast %cst_66 : f32 to vector<6x128xf32>
      %159 = arith.select %157, %158, %124 : vector<6x128xi1>, vector<6x128xf32>
      %cst_67 = arith.constant dense<0xFF800000> : vector<6xf32>
      %160 = vector.multi_reduction <maximumf>, %159, %cst_67 [1] : vector<6x128xf32> to vector<6xf32>
      %161 = vector.shape_cast %160 : vector<6xf32> to vector<6x1xf32>
      %cst_68 = arith.constant dense<0xFF800000> : vector<1xf32>
      %162 = vector.multi_reduction <maximumf>, %161, %cst_68 [0] : vector<6x1xf32> to vector<1xf32>
      %163 = vector.shape_cast %162 : vector<1xf32> to vector<1x1xf32>
      %164 = vector.broadcast %163 : vector<1x1xf32> to vector<6x128xf32>
      %165 = arith.cmpf oeq, %159, %164 : vector<6x128xf32>
      %c2147483647_i32_69 = arith.constant 2147483647 : i32
      %166 = vector.broadcast %c2147483647_i32_69 : i32 to vector<6x128xi32>
      %167 = arith.select %165, %132, %166 : vector<6x128xi1>, vector<6x128xi32>
      %cst_70 = arith.constant dense<2147483647> : vector<6xi32>
      %168 = vector.multi_reduction <minsi>, %167, %cst_70 [1] : vector<6x128xi32> to vector<6xi32>
      %169 = vector.shape_cast %168 : vector<6xi32> to vector<6x1xi32>
      %cst_71 = arith.constant dense<2147483647> : vector<1xi32>
      %170 = vector.multi_reduction <minsi>, %169, %cst_71 [0] : vector<6x1xi32> to vector<1xi32>
      %171 = vector.shape_cast %170 : vector<1xi32> to vector<1x1xi32>
      %c0_i32_72 = arith.constant 0 : i32
      %172 = vector.broadcast %c0_i32_72 : i32 to vector<2x128xi32>
      %173 = arith.cmpi eq, %115, %172 : vector<2x128xi32>
      %c1_i32_73 = arith.constant 1 : i32
      %174 = vector.broadcast %c1_i32_73 : i32 to vector<2x128xi32>
      %175 = arith.cmpi eq, %114, %174 : vector<2x128xi32>
      %176 = arith.andi %173, %175 : vector<2x128xi1>
      %177 = vector.shape_cast %163 : vector<1x1xf32> to vector<1x1xf32>
      %178 = vector.broadcast %177 : vector<1x1xf32> to vector<2x128xf32>
      %179 = arith.select %176, %178, %152 : vector<2x128xi1>, vector<2x128xf32>
      %180 = vector.shape_cast %171 : vector<1x1xi32> to vector<1x1xi32>
      %181 = vector.broadcast %180 : vector<1x1xi32> to vector<2x128xi32>
      %182 = arith.select %176, %181, %155 : vector<2x128xi1>, vector<2x128xi32>
      %183 = vector.broadcast %171 : vector<1x1xi32> to vector<6x128xi32>
      %184 = arith.cmpi eq, %132, %183 : vector<6x128xi32>
      %cst_74 = arith.constant -1.000000e+30 : f32
      %185 = vector.broadcast %cst_74 : f32 to vector<6x128xf32>
      %186 = arith.select %184, %185, %159 : vector<6x128xi1>, vector<6x128xf32>
      %cst_75 = arith.constant dense<0xFF800000> : vector<6xf32>
      %187 = vector.multi_reduction <maximumf>, %186, %cst_75 [1] : vector<6x128xf32> to vector<6xf32>
      %188 = vector.shape_cast %187 : vector<6xf32> to vector<6x1xf32>
      %cst_76 = arith.constant dense<0xFF800000> : vector<1xf32>
      %189 = vector.multi_reduction <maximumf>, %188, %cst_76 [0] : vector<6x1xf32> to vector<1xf32>
      %190 = vector.shape_cast %189 : vector<1xf32> to vector<1x1xf32>
      %191 = vector.broadcast %190 : vector<1x1xf32> to vector<6x128xf32>
      %192 = arith.cmpf oeq, %186, %191 : vector<6x128xf32>
      %c2147483647_i32_77 = arith.constant 2147483647 : i32
      %193 = vector.broadcast %c2147483647_i32_77 : i32 to vector<6x128xi32>
      %194 = arith.select %192, %132, %193 : vector<6x128xi1>, vector<6x128xi32>
      %cst_78 = arith.constant dense<2147483647> : vector<6xi32>
      %195 = vector.multi_reduction <minsi>, %194, %cst_78 [1] : vector<6x128xi32> to vector<6xi32>
      %196 = vector.shape_cast %195 : vector<6xi32> to vector<6x1xi32>
      %cst_79 = arith.constant dense<2147483647> : vector<1xi32>
      %197 = vector.multi_reduction <minsi>, %196, %cst_79 [0] : vector<6x1xi32> to vector<1xi32>
      %198 = vector.shape_cast %197 : vector<1xi32> to vector<1x1xi32>
      %c0_i32_80 = arith.constant 0 : i32
      %199 = vector.broadcast %c0_i32_80 : i32 to vector<2x128xi32>
      %200 = arith.cmpi eq, %115, %199 : vector<2x128xi32>
      %c2_i32_81 = arith.constant 2 : i32
      %201 = vector.broadcast %c2_i32_81 : i32 to vector<2x128xi32>
      %202 = arith.cmpi eq, %114, %201 : vector<2x128xi32>
      %203 = arith.andi %200, %202 : vector<2x128xi1>
      %204 = vector.shape_cast %190 : vector<1x1xf32> to vector<1x1xf32>
      %205 = vector.broadcast %204 : vector<1x1xf32> to vector<2x128xf32>
      %206 = arith.select %203, %205, %179 : vector<2x128xi1>, vector<2x128xf32>
      %207 = vector.shape_cast %198 : vector<1x1xi32> to vector<1x1xi32>
      %208 = vector.broadcast %207 : vector<1x1xi32> to vector<2x128xi32>
      %209 = arith.select %203, %208, %182 : vector<2x128xi1>, vector<2x128xi32>
      %c3_i32_82 = arith.constant 3 : i32
      %210 = vector.broadcast %c3_i32_82 : i32 to vector<6x128xi32>
      %211 = arith.cmpi sge, %113, %210 : vector<6x128xi32>
      %c6_i32 = arith.constant 6 : i32
      %212 = vector.broadcast %c6_i32 : i32 to vector<6x128xi32>
      %213 = arith.cmpi slt, %113, %212 : vector<6x128xi32>
      %214 = arith.andi %211, %213 : vector<6x128xi1>
      %cst_83 = arith.constant -1.000000e+30 : f32
      %215 = vector.broadcast %cst_83 : f32 to vector<6x128xf32>
      %216 = arith.select %214, %112, %215 : vector<6x128xi1>, vector<6x128xf32>
      %c3_i32_84 = arith.constant 3 : i32
      %217 = vector.broadcast %c3_i32_84 : i32 to vector<6x128xi32>
      %218 = arith.subi %113, %217 : vector<6x128xi32>
      %c128_i32_85 = arith.constant 128 : i32
      %219 = vector.broadcast %c128_i32_85 : i32 to vector<6x128xi32>
      %220 = arith.muli %218, %219 : vector<6x128xi32>
      %c0_86 = arith.constant 0 : index
      %c0_87 = arith.constant 0 : index
      %221 = vector.load %arg10[%c0_86, %c0_87] : memref<6x128xi32, #tpu.memory_space<vmem>>, vector<6x128xi32>
      %222 = arith.addi %220, %221 : vector<6x128xi32>
      %c2147483647_i32_88 = arith.constant 2147483647 : i32
      %223 = vector.broadcast %c2147483647_i32_88 : i32 to vector<6x128xi32>
      %224 = arith.select %214, %222, %223 : vector<6x128xi1>, vector<6x128xi32>
      %cst_89 = arith.constant dense<0xFF800000> : vector<6xf32>
      %225 = vector.multi_reduction <maximumf>, %216, %cst_89 [1] : vector<6x128xf32> to vector<6xf32>
      %226 = vector.shape_cast %225 : vector<6xf32> to vector<6x1xf32>
      %cst_90 = arith.constant dense<0xFF800000> : vector<1xf32>
      %227 = vector.multi_reduction <maximumf>, %226, %cst_90 [0] : vector<6x1xf32> to vector<1xf32>
      %228 = vector.shape_cast %227 : vector<1xf32> to vector<1x1xf32>
      %229 = vector.broadcast %228 : vector<1x1xf32> to vector<6x128xf32>
      %230 = arith.cmpf oeq, %216, %229 : vector<6x128xf32>
      %c2147483647_i32_91 = arith.constant 2147483647 : i32
      %231 = vector.broadcast %c2147483647_i32_91 : i32 to vector<6x128xi32>
      %232 = arith.select %230, %224, %231 : vector<6x128xi1>, vector<6x128xi32>
      %cst_92 = arith.constant dense<2147483647> : vector<6xi32>
      %233 = vector.multi_reduction <minsi>, %232, %cst_92 [1] : vector<6x128xi32> to vector<6xi32>
      %234 = vector.shape_cast %233 : vector<6xi32> to vector<6x1xi32>
      %cst_93 = arith.constant dense<2147483647> : vector<1xi32>
      %235 = vector.multi_reduction <minsi>, %234, %cst_93 [0] : vector<6x1xi32> to vector<1xi32>
      %236 = vector.shape_cast %235 : vector<1xi32> to vector<1x1xi32>
      %c1_i32_94 = arith.constant 1 : i32
      %237 = vector.broadcast %c1_i32_94 : i32 to vector<2x128xi32>
      %238 = arith.cmpi eq, %115, %237 : vector<2x128xi32>
      %c0_i32_95 = arith.constant 0 : i32
      %239 = vector.broadcast %c0_i32_95 : i32 to vector<2x128xi32>
      %240 = arith.cmpi eq, %114, %239 : vector<2x128xi32>
      %241 = arith.andi %238, %240 : vector<2x128xi1>
      %242 = vector.shape_cast %228 : vector<1x1xf32> to vector<1x1xf32>
      %243 = vector.broadcast %242 : vector<1x1xf32> to vector<2x128xf32>
      %244 = arith.select %241, %243, %206 : vector<2x128xi1>, vector<2x128xf32>
      %245 = vector.shape_cast %236 : vector<1x1xi32> to vector<1x1xi32>
      %246 = vector.broadcast %245 : vector<1x1xi32> to vector<2x128xi32>
      %247 = arith.select %241, %246, %209 : vector<2x128xi1>, vector<2x128xi32>
      %248 = vector.broadcast %236 : vector<1x1xi32> to vector<6x128xi32>
      %249 = arith.cmpi eq, %224, %248 : vector<6x128xi32>
      %cst_96 = arith.constant -1.000000e+30 : f32
      %250 = vector.broadcast %cst_96 : f32 to vector<6x128xf32>
      %251 = arith.select %249, %250, %216 : vector<6x128xi1>, vector<6x128xf32>
      %cst_97 = arith.constant dense<0xFF800000> : vector<6xf32>
      %252 = vector.multi_reduction <maximumf>, %251, %cst_97 [1] : vector<6x128xf32> to vector<6xf32>
      %253 = vector.shape_cast %252 : vector<6xf32> to vector<6x1xf32>
      %cst_98 = arith.constant dense<0xFF800000> : vector<1xf32>
      %254 = vector.multi_reduction <maximumf>, %253, %cst_98 [0] : vector<6x1xf32> to vector<1xf32>
      %255 = vector.shape_cast %254 : vector<1xf32> to vector<1x1xf32>
      %256 = vector.broadcast %255 : vector<1x1xf32> to vector<6x128xf32>
      %257 = arith.cmpf oeq, %251, %256 : vector<6x128xf32>
      %c2147483647_i32_99 = arith.constant 2147483647 : i32
      %258 = vector.broadcast %c2147483647_i32_99 : i32 to vector<6x128xi32>
      %259 = arith.select %257, %224, %258 : vector<6x128xi1>, vector<6x128xi32>
      %cst_100 = arith.constant dense<2147483647> : vector<6xi32>
      %260 = vector.multi_reduction <minsi>, %259, %cst_100 [1] : vector<6x128xi32> to vector<6xi32>
      %261 = vector.shape_cast %260 : vector<6xi32> to vector<6x1xi32>
      %cst_101 = arith.constant dense<2147483647> : vector<1xi32>
      %262 = vector.multi_reduction <minsi>, %261, %cst_101 [0] : vector<6x1xi32> to vector<1xi32>
      %263 = vector.shape_cast %262 : vector<1xi32> to vector<1x1xi32>
      %c1_i32_102 = arith.constant 1 : i32
      %264 = vector.broadcast %c1_i32_102 : i32 to vector<2x128xi32>
      %265 = arith.cmpi eq, %115, %264 : vector<2x128xi32>
      %c1_i32_103 = arith.constant 1 : i32
      %266 = vector.broadcast %c1_i32_103 : i32 to vector<2x128xi32>
      %267 = arith.cmpi eq, %114, %266 : vector<2x128xi32>
      %268 = arith.andi %265, %267 : vector<2x128xi1>
      %269 = vector.shape_cast %255 : vector<1x1xf32> to vector<1x1xf32>
      %270 = vector.broadcast %269 : vector<1x1xf32> to vector<2x128xf32>
      %271 = arith.select %268, %270, %244 : vector<2x128xi1>, vector<2x128xf32>
      %272 = vector.shape_cast %263 : vector<1x1xi32> to vector<1x1xi32>
      %273 = vector.broadcast %272 : vector<1x1xi32> to vector<2x128xi32>
      %274 = arith.select %268, %273, %247 : vector<2x128xi1>, vector<2x128xi32>
      %275 = vector.broadcast %263 : vector<1x1xi32> to vector<6x128xi32>
      %276 = arith.cmpi eq, %224, %275 : vector<6x128xi32>
      %cst_104 = arith.constant -1.000000e+30 : f32
      %277 = vector.broadcast %cst_104 : f32 to vector<6x128xf32>
      %278 = arith.select %276, %277, %251 : vector<6x128xi1>, vector<6x128xf32>
      %cst_105 = arith.constant dense<0xFF800000> : vector<6xf32>
      %279 = vector.multi_reduction <maximumf>, %278, %cst_105 [1] : vector<6x128xf32> to vector<6xf32>
      %280 = vector.shape_cast %279 : vector<6xf32> to vector<6x1xf32>
      %cst_106 = arith.constant dense<0xFF800000> : vector<1xf32>
      %281 = vector.multi_reduction <maximumf>, %280, %cst_106 [0] : vector<6x1xf32> to vector<1xf32>
      %282 = vector.shape_cast %281 : vector<1xf32> to vector<1x1xf32>
      %283 = vector.broadcast %282 : vector<1x1xf32> to vector<6x128xf32>
      %284 = arith.cmpf oeq, %278, %283 : vector<6x128xf32>
      %c2147483647_i32_107 = arith.constant 2147483647 : i32
      %285 = vector.broadcast %c2147483647_i32_107 : i32 to vector<6x128xi32>
      %286 = arith.select %284, %224, %285 : vector<6x128xi1>, vector<6x128xi32>
      %cst_108 = arith.constant dense<2147483647> : vector<6xi32>
      %287 = vector.multi_reduction <minsi>, %286, %cst_108 [1] : vector<6x128xi32> to vector<6xi32>
      %288 = vector.shape_cast %287 : vector<6xi32> to vector<6x1xi32>
      %cst_109 = arith.constant dense<2147483647> : vector<1xi32>
      %289 = vector.multi_reduction <minsi>, %288, %cst_109 [0] : vector<6x1xi32> to vector<1xi32>
      %290 = vector.shape_cast %289 : vector<1xi32> to vector<1x1xi32>
      %c1_i32_110 = arith.constant 1 : i32
      %291 = vector.broadcast %c1_i32_110 : i32 to vector<2x128xi32>
      %292 = arith.cmpi eq, %115, %291 : vector<2x128xi32>
      %c2_i32_111 = arith.constant 2 : i32
      %293 = vector.broadcast %c2_i32_111 : i32 to vector<2x128xi32>
      %294 = arith.cmpi eq, %114, %293 : vector<2x128xi32>
      %295 = arith.andi %292, %294 : vector<2x128xi1>
      %296 = vector.shape_cast %282 : vector<1x1xf32> to vector<1x1xf32>
      %297 = vector.broadcast %296 : vector<1x1xf32> to vector<2x128xf32>
      %298 = arith.select %295, %297, %271 : vector<2x128xi1>, vector<2x128xf32>
      %299 = vector.shape_cast %290 : vector<1x1xi32> to vector<1x1xi32>
      %300 = vector.broadcast %299 : vector<1x1xi32> to vector<2x128xi32>
      %301 = arith.select %295, %300, %274 : vector<2x128xi1>, vector<2x128xi32>
      %c0_112 = arith.constant 0 : index
      %c0_113 = arith.constant 0 : index
      %302 = vector.load %arg5[%c0_112, %c0_113] : memref<2x128xf32, #tpu.memory_space<vmem>>, vector<2x128xf32>
      tpu.vector_store %arg5[%c0_112, %c0_113], %298 {strides = array<i32>} : memref<2x128xf32, #tpu.memory_space<vmem>>, vector<2x128xf32>,
      %c0_114 = arith.constant 0 : index
      %c0_115 = arith.constant 0 : index
      %303 = vector.load %arg6[%c0_114, %c0_115] : memref<2x128xi32, #tpu.memory_space<vmem>>, vector<2x128xi32>
      tpu.vector_store %arg6[%c0_114, %c0_115], %301 {strides = array<i32>} : memref<2x128xi32, #tpu.memory_space<vmem>>, vector<2x128xi32>,
    } else {
    }
    return
  }
  func.func @transform_0(%arg0: i32) -> (i32, i32) {
    %c0_i32 = arith.constant 0 : i32
    %c0_i32_0 = arith.constant 0 : i32
    %c0_i32_1 = arith.constant 0 : i32
    return %c0_i32, %c0_i32_0 : i32, i32
  }
  func.func @transform_1(%arg0: i32) -> (i32, i32) {
    %c0_i32 = arith.constant 0 : i32
    %c0_i32_0 = arith.constant 0 : i32
    %c0_i32_1 = arith.constant 0 : i32
    return %c0_i32, %c0_i32_0 : i32, i32
  }
  func.func @transform_2(%arg0: i32) -> (i32, i32) {
    %c0_i32 = arith.constant 0 : i32
    %c0_i32_0 = arith.constant 0 : i32
    return %c0_i32, %arg0 : i32, i32
  }
  func.func @transform_3(%arg0: i32) -> (i32, i32) {
    %c0_i32 = arith.constant 0 : i32
    %c0_i32_0 = arith.constant 0 : i32
    return %c0_i32, %arg0 : i32, i32
  }
  func.func @transform_4(%arg0: i32) -> (i32, i32) {
    %c0_i32 = arith.constant 0 : i32
    %c0_i32_0 = arith.constant 0 : i32
    %c0_i32_1 = arith.constant 0 : i32
    return %c0_i32, %c0_i32_0 : i32, i32
  }
  func.func @transform_5(%arg0: i32) -> (i32, i32) {
    %c0_i32 = arith.constant 0 : i32
    %c0_i32_0 = arith.constant 0 : i32
    %c0_i32_1 = arith.constant 0 : i32
    return %c0_i32, %c0_i32_0 : i32, i32
  }
}

</mosaic_0001>

<llo_original>
// kernel: asr_beam_search.4
$region0: #{asr_beam_search.4}
  #allocation0 [shape = 'u32[]', space=smem, size = 0x4, offset = 0x4, fixed_abs, tag = 'smem constant byte address 0x4 - core index']
  #allocation1 [shape = 'u32[144,128]{1,0:T(1,128)}', space=vmem, size = 0x12000, scoped, tag = 'internal scratch']
  #allocation2 [shape = 'f32[2,1]{1,0:T(2,128)}', space=vmem, size = 0x400, scoped, tag = 'scratch operand']
  #allocation3 [shape = 'f32[2,1]{1,0:T(2,128)}', space=vmem, size = 0x400, scoped, tag = 'scratch operand']
  #allocation4 [shape = 'f32[2,128]{1,0:T(2,128)}', space=vmem, size = 0x400, scoped, tag = 'scratch operand']
  #allocation5 [shape = 's32[2,128]{1,0:T(2,128)}', space=vmem, size = 0x400, scoped, tag = 'scratch operand']
  %s0 = inlined_call_operand.vmem [shape: bf16[2,32], index: 0, kind: input, shape index: {}]
  %s1 = inlined_call_operand.vmem [shape: f32[2,1], index: 1, kind: input, shape index: {}]
  %s2 = inlined_call_operand.vmem [shape: bf16[32,128], index: 2, kind: input, shape index: {}]
  %s3 = inlined_call_operand.vmem [shape: f32[1,128], index: 3, kind: input, shape index: {}]
  %s4 = inlined_call_operand.vmem [shape: f32[2,128], index: 4, kind: output, shape index: {0}]
  %s5 = inlined_call_operand.vmem [shape: s32[2,128], index: 5, kind: output, shape index: {1}]
  %6 = xla_tuple %s4, %s5
  %s7 = sld [smem:[#allocation0]]
  $region42: #{asr_beam_search.4} parent=0
    _
  %s9 = ssub.s32 1, %s7
  %s10 = scalar_select 0, %s9, %s7
  // Predicated region
  $region2: #{asr_beam_search.4} parent=0 // pred_check
    _
  $region3: #{asr_beam_search.4} parent=0 // pred_check_branch
    %12 = sbr.rel (0) target = $region5
  $region4: #{asr_beam_search.4} parent=0 // pred_region
    _
  $region5: #{asr_beam_search.4} parent=0 // pred_fallthru
    _
  // Predicated region
  $region6: #{asr_beam_search.4} parent=0 // pred_check
    _
  $region7: #{asr_beam_search.4} parent=0 // pred_check_branch
    %14 = sbr.rel (0) target = $region9
  $region8: #{asr_beam_search.4} parent=0 // pred_region
    _
  $region9: #{asr_beam_search.4} parent=0 // pred_fallthru
    _
  // Predicated region
  $region10: #{asr_beam_search.4} parent=0 // pred_check
    _
  $region11: #{asr_beam_search.4} parent=0 // pred_check_branch
    %16 = sbr.rel (0) target = $region13
  $region12: #{asr_beam_search.4} parent=0 // pred_region
    _
  $region13: #{asr_beam_search.4} parent=0 // pred_fallthru
    _
  // Predicated region
  $region14: #{asr_beam_search.4} parent=0 // pred_check
    _
  $region15: #{asr_beam_search.4} parent=0 // pred_check_branch
    %18 = sbr.rel (0) target = $region17
  $region16: #{asr_beam_search.4} parent=0 // pred_region
    _
  $region17: #{asr_beam_search.4} parent=0 // pred_fallthru
    _
  %p20 = scmp.eq.s32.totalorder 0, 0
  // Predicated region
  $region18: #{asr_beam_search.4} parent=0 // pred_check
    %p21 = pneg %p20
  $region19: #{asr_beam_search.4} parent=0 // pred_check_branch
    %23 = sbr.rel (%p21) target = $region21
  $region20: #{asr_beam_search.4} parent=0 // pred_region
    %vm24 = vcmask 1024
    %25 = vst.msk [vmem:[#allocation2] sm:$0x3] %vm24, -1e+30
    %26 = vst.msk [vmem:[#allocation3] sm:$0x3] %vm24, 0.0
    %27 = vst [vmem:[#allocation4] sm:$0x3] -1e+30
    %28 = vst [vmem:[#allocation5] sm:$0x3] 0
  $region21: #{asr_beam_search.4} parent=0 // pred_fallthru
    _
  %v29 = vld [vmem:[%s0] sm:$0x1]
  %v30 = vld [vmem:[%s2] sm:$0xf]
  %v31 = vld [vmem:[%s2 + $0x4] sm:$0xf]
  %v32 = vld [vmem:[%s2 + $0x8] sm:$0xf]
  %v33 = vld [vmem:[%s2 + $0xc] sm:$0xf]
  %v34 = vld [vmem:[%s3] sm:$0x1]
  %v36 = vlaneseq
  %v37 = vshrl.u32 %v36, 7
  %v38 = vsub.s32 0, %v37
  %v39 = vrot.slane %v34, %v38
  %v45 = vunpack.c.l.b16 %v30
  %v46 = vunpack.c.l.b16 %v31
  %v47 = vunpack.c.l.b16 %v32
  %v48 = vunpack.c.l.b16 %v33
  %v49 = vpack.c.b16 %v46, %v45
  %v50 = vpack.c.b16 %v48, %v47
  %vm53 = vcmask 261120
  %v55 = vsel %vm53, %v29, 0
  %57 = vmatprep.subr.bf16.mxu0 0
  %58 = vmatpush1.bf16.msra.mxu0 %v49
  %59 = vmatprep.subr.bf16.mxu0 0
  %60 = vmatpush1.bf16.msra.mxu0 %v50
  %61 = vmatprep.subr.bf16.mxu0 0
  %62 = vmatpush1.bf16.msra.mxu0 0
  %63 = vmatprep.subr.bf16.mxu0 0
  %64 = vmatpush1.bf16.msra.mxu0 0
  %65 = vmatprep.subr.bf16.mxu0 0
  %66 = vmatpush1.bf16.msra.mxu0 0
  %67 = vmatprep.subr.bf16.mxu0 0
  %68 = vmatpush1.bf16.msra.mxu0 0
  %69 = vmatprep.subr.bf16.mxu0 0
  %70 = vmatpush1.bf16.msra.mxu0 0
  %71 = vmatprep.subr.bf16.mxu0 0
  %72 = vmatpush1.bf16.msra.mxu0 0
  %73 = vmatprep.subr.bf16.mxu0 0
  %74 = vmatpush1.bf16.msra.mxu0 0
  %75 = vmatprep.subr.bf16.mxu0 0
  %76 = vmatpush1.bf16.msra.mxu0 0
  %77 = vmatprep.subr.bf16.mxu0 0
  %78 = vmatpush1.bf16.msra.mxu0 0
  %79 = vmatprep.subr.bf16.mxu0 0
  %80 = vmatpush1.bf16.msra.mxu0 0
  %81 = vmatprep.subr.bf16.mxu0 0
  %82 = vmatpush1.bf16.msra.mxu0 0
  %83 = vmatprep.subr.bf16.mxu0 0
  %84 = vmatpush1.bf16.msra.mxu0 0
  %85 = vmatprep.subr.bf16.mxu0 0
  %86 = vmatpush1.bf16.msra.mxu0 0
  %87 = vmatprep.subr.bf16.mxu0 0
  %88 = vmatpush1.bf16.msra.mxu0 0
  %89 = vmatprep.mubr.bf16.mxu0 0
  %90 = vmatmul.mubr.bf16.gmra.mrb[0].mxu0 %v55
  %v91 = vpop.f32.mrb[0].mxu0
  %v92 = vadd.f32 %v39, %v91
  %v93 = vpop.f32.mrb[0].mxu0
  %v94 = vpop.f32.mrb[0].mxu0
  %v95 = vpop.f32.mrb[0].mxu0
  %96 = vdwg.mxu0
  %v97 = vld [vmem:[#allocation2] sm:$0x3]
  %vm98 = vcmask 1041408
  %v99 = vsel %vm98, %v92, -inf
  %100 = vmax.xlane.f32.xlu0 %v99
  %v101 = vpop.xlane.xlu0 %100
  %v102 = vmax.f32 %v97, %v101
  %v103 = vld [vmem:[#allocation3] sm:$0x3]
  %v104 = vsub.f32 %v97, %v102
  %v105 = vmul.f32 %v104, 1.442695
  %v106 = vpow.pop %v105
  %v107 = vmul.f32 %v103, %v106
  %109 = vset.pattern.permute.xlu0 0
  %110 = vperm.xlu0 %109, %v102
  %v111 = vpop.permute.xlu0 %110
  %v113 = vsub.f32 %v92, %v111
  %v114 = vmul.f32 %v113, 1.442695
  %v115 = vpow.pop %v114
  %v116 = vsel %vm98, %v115, 0.0
  %117 = vadd.xlane.f32.xlu0 %v116
  %v118 = vpop.xlane.xlu0 %117
  %v119 = vadd.f32 %v107, %v118
  %vm120 = vcmask 1024
  %121 = vst.msk [vmem:[#allocation3] sm:$0x3] %vm120, %v119
  %122 = vst.msk [vmem:[#allocation2] sm:$0x3] %vm120, %v102
  %s123 = smul.u32 0, 128
  %v124 = vlaneseq
  %v125 = vand.u32 %v124, 127
  %v126 = vstv %s123
  %v127 = vadd.s32 %v126, %v125
  %v128 = vld [vmem:[#allocation4] sm:$0x3]
  %v129 = vld [vmem:[#allocation5] sm:$0x3]
  %v130 = vsel %vm98, %v128, -inf
  %v131 = vmax.f32 %v130, %v99
  %132 = vmax.xlane.f32.xlu0 %v131
  %v133 = vpop.xlane.xlu0 %132
  %vm134 = vcmp.eq.f32.partialorder %v128, %v133
  %vm135 = vcmp.eq.f32.partialorder %v92, %v133
  %v136 = vsel %vm134, %v129, 2147483647
  %v137 = vsel %vm135, %v127, 2147483647
  %v138 = vsel %vm98, %v136, 2147483647
  %v139 = vsel %vm98, %v137, 2147483647
  %vm140 = vcmp.lt.s32.totalorder %v138, %v139
  %v141 = vsel %vm140, %v138, %v139
  %v142 = vand.u32 %v141, 65535
  %v143 = vshra.s32 %v141, 16
  %v144 = vcvt.s32.f32 %v142
  %v145 = vcvt.s32.f32 %v143
  %146 = vmin.xlane.f32.xlu0 %v145
  %v147 = vpop.xlane.xlu0 %146
  %vm148 = vcmp.eq.f32.partialorder %v145, %v147
  %v149 = vsel %vm148, %v144, inf
  %150 = vmin.xlane.f32.xlu0 %v149
  %v151 = vpop.xlane.xlu0 %150
  %v152 = vcvt.f32.s32 %v151
  %v153 = vcvt.f32.s32 %v147
  %v154 = vshll.u32 %v153, 16
  %v155 = vadd.s32 %v154, %v152
  %vm156 = vcmp.eq.s32.totalorder %v125, 0
  %v157 = vsel %vm156, %v133, -1e+30
  %v158 = vsel %vm156, %v155, 0
  %vm159 = vcmp.eq.s32.totalorder %v129, %v155
  %vm160 = vcmp.eq.s32.totalorder %v127, %v155
  %v161 = vsel %vm159, -1e+30, %v128
  %v162 = vsel %vm160, -1e+30, %v92
  %v163 = vsel %vm98, %v161, -inf
  %v164 = vsel %vm98, %v162, -inf
  %v165 = vmax.f32 %v163, %v164
  %166 = vmax.xlane.f32.xlu0 %v165
  %v167 = vpop.xlane.xlu0 %166
  %vm168 = vcmp.eq.f32.partialorder %v161, %v167
  %vm169 = vcmp.eq.f32.partialorder %v162, %v167
  %v170 = vsel %vm168, %v129, 2147483647
  %v171 = vsel %vm169, %v127, 2147483647
  %v172 = vsel %vm98, %v170, 2147483647
  %v173 = vsel %vm98, %v171, 2147483647
  %vm174 = vcmp.lt.s32.totalorder %v172, %v173
  %v175 = vsel %vm174, %v172, %v173
  %v176 = vand.u32 %v175, 65535
  %v177 = vshra.s32 %v175, 16
  %v178 = vcvt.s32.f32 %v176
  %v179 = vcvt.s32.f32 %v177
  %180 = vmin.xlane.f32.xlu0 %v179
  %v181 = vpop.xlane.xlu0 %180
  %vm182 = vcmp.eq.f32.partialorder %v179, %v181
  %v183 = vsel %vm182, %v178, inf
  %184 = vmin.xlane.f32.xlu0 %v183
  %v185 = vpop.xlane.xlu0 %184
  %v186 = vcvt.f32.s32 %v185
  %v187 = vcvt.f32.s32 %v181
  %v188 = vshll.u32 %v187, 16
  %v189 = vadd.s32 %v188, %v186
  %vm190 = vcmp.eq.s32.totalorder %v125, 1
  %v191 = vsel %vm190, %v167, %v157
  %v192 = vsel %vm190, %v189, %v158
  %vm193 = vcmp.eq.s32.totalorder %v129, %v189
  %vm194 = vcmp.eq.s32.totalorder %v127, %v189
  %v195 = vsel %vm193, -1e+30, %v161
  %v196 = vsel %vm194, -1e+30, %v162
  %v197 = vsel %vm98, %v195, -inf
  %v198 = vsel %vm98, %v196, -inf
  %v199 = vmax.f32 %v197, %v198
  %200 = vmax.xlane.f32.xlu0 %v199
  %v201 = vpop.xlane.xlu0 %200
  %vm202 = vcmp.eq.f32.partialorder %v195, %v201
  %vm203 = vcmp.eq.f32.partialorder %v196, %v201
  %v204 = vsel %vm202, %v129, 2147483647
  %v205 = vsel %vm203, %v127, 2147483647
  %v206 = vsel %vm98, %v204, 2147483647
  %v207 = vsel %vm98, %v205, 2147483647
  %vm208 = vcmp.lt.s32.totalorder %v206, %v207
  %v209 = vsel %vm208, %v206, %v207
  %v210 = vand.u32 %v209, 65535
  %v211 = vshra.s32 %v209, 16
  %v212 = vcvt.s32.f32 %v210
  %v213 = vcvt.s32.f32 %v211
  %214 = vmin.xlane.f32.xlu0 %v213
  %v215 = vpop.xlane.xlu0 %214
  %vm216 = vcmp.eq.f32.partialorder %v213, %v215
  %v217 = vsel %vm216, %v212, inf
  %218 = vmin.xlane.f32.xlu0 %v217
  %v219 = vpop.xlane.xlu0 %218
  %v220 = vcvt.f32.s32 %v219
  %v221 = vcvt.f32.s32 %v215
  %v222 = vshll.u32 %v221, 16
  %v223 = vadd.s32 %v222, %v220
  %vm224 = vcmp.eq.s32.totalorder %v125, 2
  %v225 = vsel %vm224, %v201, %v191
  %v226 = vsel %vm224, %v223, %v192
  %227 = vst [vmem:[#allocation4] sm:$0x3] %v225
  %228 = vst [vmem:[#allocation5] sm:$0x3] %v226
  // Predicated region
  $region22: #{asr_beam_search.4} parent=0 // pred_check
    %p229 = pneg %p20
  $region23: #{asr_beam_search.4} parent=0 // pred_check_branch
    %231 = sbr.rel (%p229) target = $region25
  $region24: #{asr_beam_search.4} parent=0 // pred_region
    %v232 = vld [vmem:[#allocation2] sm:$0x3]
    %v233 = vld [vmem:[#allocation3] sm:$0x3]
    %v234 = vlog2.pop %v233
    %v235 = vmul.f32 %v234, 0.6931472
    %v236 = vadd.f32 %v232, %v235
    %v237 = vld [vmem:[%s1] sm:$0x3]
    %v238 = vld [vmem:[#allocation4] sm:$0x3]
    %240 = vset.pattern.permute.xlu0 0
    %241 = vperm.xlu0 %240, %v237
    %v242 = vpop.permute.xlu0 %241
    %v244 = vadd.f32 %v242, %v238
    %246 = vset.pattern.permute.xlu0 0
    %247 = vperm.xlu0 %246, %v236
    %v248 = vpop.permute.xlu0 %247
    %v250 = vsub.f32 %v244, %v248
    %v251 = vlaneseq
    %v252 = vshrl.u32 %v251, 7
    %vm253 = vcmp.ge.s32.totalorder %v252, 0
    %vm254 = vcmp.lt.s32.totalorder %v252, 1
    %vm255 = vmand %vm253, %vm254
    %v256 = vsel %vm255, %v250, -1e+30
    %v257 = vmul.u32 %v252, 128
    %v258 = vld [vmem:[#allocation5] sm:$0x3]
    %v259 = vadd.s32 %v257, %v258
    %v260 = vsel %vm255, %v259, 2147483647
    %v261 = vsel %vm98, %v256, -inf
    %262 = vmax.xlane.f32.xlu0 %v261
    %v263 = vpop.xlane.xlu0 %262
    %v264 = vsel %vm98, %v263, -inf
    %v265 = vrot.slane %v264, 4
    %v266 = vmax.f32 %v264, %v265
    %v267 = vrot.slane %v266, 2
    %v268 = vmax.f32 %v266, %v267
    %v269 = vrot.slane %v268, 1
    %v270 = vmax.f32 %v268, %v269
    %vm271 = vcmp.eq.f32.partialorder %v256, %v270
    %v272 = vsel %vm271, %v260, 2147483647
    %v273 = vsel %vm98, %v272, 2147483647
    %v274 = vand.u32 %v273, 65535
    %v275 = vshra.s32 %v273, 16
    %v276 = vcvt.s32.f32 %v274
    %v277 = vcvt.s32.f32 %v275
    %278 = vmin.xlane.f32.xlu0 %v277
    %v279 = vpop.xlane.xlu0 %278
    %vm280 = vcmp.eq.f32.partialorder %v277, %v279
    %v281 = vsel %vm280, %v276, inf
    %282 = vmin.xlane.f32.xlu0 %v281
    %v283 = vpop.xlane.xlu0 %282
    %v284 = vcvt.f32.s32 %v283
    %v285 = vcvt.f32.s32 %v279
    %v286 = vshll.u32 %v285, 16
    %v287 = vadd.s32 %v286, %v284
    %v288 = vsel %vm98, %v287, 2147483647
    %v289 = vrot.slane %v288, 4
    %vm290 = vcmp.lt.s32.totalorder %v288, %v289
    %v291 = vsel %vm290, %v288, %v289
    %v292 = vrot.slane %v291, 2
    %vm293 = vcmp.lt.s32.totalorder %v291, %v292
    %v294 = vsel %vm293, %v291, %v292
    %v295 = vrot.slane %v294, 1
    %vm296 = vcmp.lt.s32.totalorder %v294, %v295
    %v297 = vsel %vm296, %v294, %v295
    %vm298 = vcmp.eq.s32.totalorder %v252, 0
    %vm299 = vmand %vm298, %vm156
    %v300 = vsel %vm299, %v270, -1e+30
    %v301 = vsel %vm299, %v297, 0
    %vm302 = vcmp.eq.s32.totalorder %v260, %v297
    %v303 = vsel %vm302, -1e+30, %v256
    %v304 = vsel %vm98, %v303, -inf
    %305 = vmax.xlane.f32.xlu0 %v304
    %v306 = vpop.xlane.xlu0 %305
    %v307 = vsel %vm98, %v306, -inf
    %v308 = vrot.slane %v307, 4
    %v309 = vmax.f32 %v307, %v308
    %v310 = vrot.slane %v309, 2
    %v311 = vmax.f32 %v309, %v310
    %v312 = vrot.slane %v311, 1
    %v313 = vmax.f32 %v311, %v312
    %vm314 = vcmp.eq.f32.partialorder %v303, %v313
    %v315 = vsel %vm314, %v260, 2147483647
    %v316 = vsel %vm98, %v315, 2147483647
    %v317 = vand.u32 %v316, 65535
    %v318 = vshra.s32 %v316, 16
    %v319 = vcvt.s32.f32 %v317
    %v320 = vcvt.s32.f32 %v318
    %321 = vmin.xlane.f32.xlu0 %v320
    %v322 = vpop.xlane.xlu0 %321
    %vm323 = vcmp.eq.f32.partialorder %v320, %v322
    %v324 = vsel %vm323, %v319, inf
    %325 = vmin.xlane.f32.xlu0 %v324
    %v326 = vpop.xlane.xlu0 %325
    %v327 = vcvt.f32.s32 %v326
    %v328 = vcvt.f32.s32 %v322
    %v329 = vshll.u32 %v328, 16
    %v330 = vadd.s32 %v329, %v327
    %v331 = vsel %vm98, %v330, 2147483647
    %v332 = vrot.slane %v331, 4
    %vm333 = vcmp.lt.s32.totalorder %v331, %v332
    %v334 = vsel %vm333, %v331, %v332
    %v335 = vrot.slane %v334, 2
    %vm336 = vcmp.lt.s32.totalorder %v334, %v335
    %v337 = vsel %vm336, %v334, %v335
    %v338 = vrot.slane %v337, 1
    %vm339 = vcmp.lt.s32.totalorder %v337, %v338
    %v340 = vsel %vm339, %v337, %v338
    %vm341 = vmand %vm298, %vm190
    %v342 = vsel %vm341, %v313, %v300
    %v343 = vsel %vm341, %v340, %v301
    %vm344 = vcmp.eq.s32.totalorder %v260, %v340
    %v345 = vsel %vm344, -1e+30, %v303
    %v346 = vsel %vm98, %v345, -inf
    %347 = vmax.xlane.f32.xlu0 %v346
    %v348 = vpop.xlane.xlu0 %347
    %v349 = vsel %vm98, %v348, -inf
    %v350 = vrot.slane %v349, 4
    %v351 = vmax.f32 %v349, %v350
    %v352 = vrot.slane %v351, 2
    %v353 = vmax.f32 %v351, %v352
    %v354 = vrot.slane %v353, 1
    %v355 = vmax.f32 %v353, %v354
    %vm356 = vcmp.eq.f32.partialorder %v345, %v355
    %v357 = vsel %vm356, %v260, 2147483647
    %v358 = vsel %vm98, %v357, 2147483647
    %v359 = vand.u32 %v358, 65535
    %v360 = vshra.s32 %v358, 16
    %v361 = vcvt.s32.f32 %v359
    %v362 = vcvt.s32.f32 %v360
    %363 = vmin.xlane.f32.xlu0 %v362
    %v364 = vpop.xlane.xlu0 %363
    %vm365 = vcmp.eq.f32.partialorder %v362, %v364
    %v366 = vsel %vm365, %v361, inf
    %367 = vmin.xlane.f32.xlu0 %v366
    %v368 = vpop.xlane.xlu0 %367
    %v369 = vcvt.f32.s32 %v368
    %v370 = vcvt.f32.s32 %v364
    %v371 = vshll.u32 %v370, 16
    %v372 = vadd.s32 %v371, %v369
    %v373 = vsel %vm98, %v372, 2147483647
    %v374 = vrot.slane %v373, 4
    %vm375 = vcmp.lt.s32.totalorder %v373, %v374
    %v376 = vsel %vm375, %v373, %v374
    %v377 = vrot.slane %v376, 2
    %vm378 = vcmp.lt.s32.totalorder %v376, %v377
    %v379 = vsel %vm378, %v376, %v377
    %v380 = vrot.slane %v379, 1
    %vm381 = vcmp.lt.s32.totalorder %v379, %v380
    %v382 = vsel %vm381, %v379, %v380
    %vm383 = vmand %vm298, %vm224
    %v384 = vsel %vm383, %v355, %v342
    %v385 = vsel %vm383, %v382, %v343
    %vm386 = vcmp.ge.s32.totalorder %v252, 1
    %vm387 = vcmp.lt.s32.totalorder %v252, 2
    %vm388 = vmand %vm386, %vm387
    %v389 = vsel %vm388, %v250, -1e+30
    %v390 = vsub.s32 %v252, 1
    %v391 = vmul.u32 %v390, 128
    %v392 = vadd.s32 %v391, %v258
    %v393 = vsel %vm388, %v392, 2147483647
    %v394 = vsel %vm98, %v389, -inf
    %395 = vmax.xlane.f32.xlu0 %v394
    %v396 = vpop.xlane.xlu0 %395
    %v397 = vsel %vm98, %v396, -inf
    %v398 = vrot.slane %v397, 4
    %v399 = vmax.f32 %v397, %v398
    %v400 = vrot.slane %v399, 2
    %v401 = vmax.f32 %v399, %v400
    %v402 = vrot.slane %v401, 1
    %v403 = vmax.f32 %v401, %v402
    %vm404 = vcmp.eq.f32.partialorder %v389, %v403
    %v405 = vsel %vm404, %v393, 2147483647
    %v406 = vsel %vm98, %v405, 2147483647
    %v407 = vand.u32 %v406, 65535
    %v408 = vshra.s32 %v406, 16
    %v409 = vcvt.s32.f32 %v407
    %v410 = vcvt.s32.f32 %v408
    %411 = vmin.xlane.f32.xlu0 %v410
    %v412 = vpop.xlane.xlu0 %411
    %vm413 = vcmp.eq.f32.partialorder %v410, %v412
    %v414 = vsel %vm413, %v409, inf
    %415 = vmin.xlane.f32.xlu0 %v414
    %v416 = vpop.xlane.xlu0 %415
    %v417 = vcvt.f32.s32 %v416
    %v418 = vcvt.f32.s32 %v412
    %v419 = vshll.u32 %v418, 16
    %v420 = vadd.s32 %v419, %v417
    %v421 = vsel %vm98, %v420, 2147483647
    %v422 = vrot.slane %v421, 4
    %vm423 = vcmp.lt.s32.totalorder %v421, %v422
    %v424 = vsel %vm423, %v421, %v422
    %v425 = vrot.slane %v424, 2
    %vm426 = vcmp.lt.s32.totalorder %v424, %v425
    %v427 = vsel %vm426, %v424, %v425
    %v428 = vrot.slane %v427, 1
    %vm429 = vcmp.lt.s32.totalorder %v427, %v428
    %v430 = vsel %vm429, %v427, %v428
    %vm431 = vcmp.eq.s32.totalorder %v252, 1
    %vm432 = vmand %vm431, %vm156
    %v433 = vsel %vm432, %v403, %v384
    %v434 = vsel %vm432, %v430, %v385
    %vm435 = vcmp.eq.s32.totalorder %v393, %v430
    %v436 = vsel %vm435, -1e+30, %v389
    %v437 = vsel %vm98, %v436, -inf
    %438 = vmax.xlane.f32.xlu0 %v437
    %v439 = vpop.xlane.xlu0 %438
    %v440 = vsel %vm98, %v439, -inf
    %v441 = vrot.slane %v440, 4
    %v442 = vmax.f32 %v440, %v441
    %v443 = vrot.slane %v442, 2
    %v444 = vmax.f32 %v442, %v443
    %v445 = vrot.slane %v444, 1
    %v446 = vmax.f32 %v444, %v445
    %vm447 = vcmp.eq.f32.partialorder %v436, %v446
    %v448 = vsel %vm447, %v393, 2147483647
    %v449 = vsel %vm98, %v448, 2147483647
    %v450 = vand.u32 %v449, 65535
    %v451 = vshra.s32 %v449, 16
    %v452 = vcvt.s32.f32 %v450
    %v453 = vcvt.s32.f32 %v451
    %454 = vmin.xlane.f32.xlu0 %v453
    %v455 = vpop.xlane.xlu0 %454
    %vm456 = vcmp.eq.f32.partialorder %v453, %v455
    %v457 = vsel %vm456, %v452, inf
    %458 = vmin.xlane.f32.xlu0 %v457
    %v459 = vpop.xlane.xlu0 %458
    %v460 = vcvt.f32.s32 %v459
    %v461 = vcvt.f32.s32 %v455
    %v462 = vshll.u32 %v461, 16
    %v463 = vadd.s32 %v462, %v460
    %v464 = vsel %vm98, %v463, 2147483647
    %v465 = vrot.slane %v464, 4
    %vm466 = vcmp.lt.s32.totalorder %v464, %v465
    %v467 = vsel %vm466, %v464, %v465
    %v468 = vrot.slane %v467, 2
    %vm469 = vcmp.lt.s32.totalorder %v467, %v468
    %v470 = vsel %vm469, %v467, %v468
    %v471 = vrot.slane %v470, 1
    %vm472 = vcmp.lt.s32.totalorder %v470, %v471
    %v473 = vsel %vm472, %v470, %v471
    %vm474 = vmand %vm431, %vm190
    %v475 = vsel %vm474, %v446, %v433
    %v476 = vsel %vm474, %v473, %v434
    %vm477 = vcmp.eq.s32.totalorder %v393, %v473
    %v478 = vsel %vm477, -1e+30, %v436
    %v479 = vsel %vm98, %v478, -inf
    %480 = vmax.xlane.f32.xlu0 %v479
    %v481 = vpop.xlane.xlu0 %480
    %v482 = vsel %vm98, %v481, -inf
    %v483 = vrot.slane %v482, 4
    %v484 = vmax.f32 %v482, %v483
    %v485 = vrot.slane %v484, 2
    %v486 = vmax.f32 %v484, %v485
    %v487 = vrot.slane %v486, 1
    %v488 = vmax.f32 %v486, %v487
    %vm489 = vcmp.eq.f32.partialorder %v478, %v488
    %v490 = vsel %vm489, %v393, 2147483647
    %v491 = vsel %vm98, %v490, 2147483647
    %v492 = vand.u32 %v491, 65535
    %v493 = vshra.s32 %v491, 16
    %v494 = vcvt.s32.f32 %v492
    %v495 = vcvt.s32.f32 %v493
    %496 = vmin.xlane.f32.xlu0 %v495
    %v497 = vpop.xlane.xlu0 %496
    %vm498 = vcmp.eq.f32.partialorder %v495, %v497
    %v499 = vsel %vm498, %v494, inf
    %500 = vmin.xlane.f32.xlu0 %v499
    %v501 = vpop.xlane.xlu0 %500
    %v502 = vcvt.f32.s32 %v501
    %v503 = vcvt.f32.s32 %v497
    %v504 = vshll.u32 %v503, 16
    %v505 = vadd.s32 %v504, %v502
    %v506 = vsel %vm98, %v505, 2147483647
    %v507 = vrot.slane %v506, 4
    %vm508 = vcmp.lt.s32.totalorder %v506, %v507
    %v509 = vsel %vm508, %v506, %v507
    %v510 = vrot.slane %v509, 2
    %vm511 = vcmp.lt.s32.totalorder %v509, %v510
    %v512 = vsel %vm511, %v509, %v510
    %v513 = vrot.slane %v512, 1
    %vm514 = vcmp.lt.s32.totalorder %v512, %v513
    %v515 = vsel %vm514, %v512, %v513
    %vm516 = vmand %vm431, %vm224
    %v517 = vsel %vm516, %v488, %v475
    %v518 = vsel %vm516, %v515, %v476
    %519 = vst [vmem:[%s4] sm:$0x3] %v517
    %520 = vst [vmem:[%s5] sm:$0x3] %v518
  $region25: #{asr_beam_search.4} parent=0 // pred_fallthru
    _
  // Predicated region
  $region26: #{asr_beam_search.4} parent=0 // pred_check
    _
  $region27: #{asr_beam_search.4} parent=0 // pred_check_branch
    %522 = sbr.rel (0) target = $region29
  $region28: #{asr_beam_search.4} parent=0 // pred_region
    _
  $region29: #{asr_beam_search.4} parent=0 // pred_fallthru
    _
  // Predicated region
  $region30: #{asr_beam_search.4} parent=0 // pred_check
    _
  $region31: #{asr_beam_search.4} parent=0 // pred_check_branch
    %524 = sbr.rel (0) target = $region33
  $region32: #{asr_beam_search.4} parent=0 // pred_region
    _
  $region33: #{asr_beam_search.4} parent=0 // pred_fallthru
    _
  // Predicated region
  $region34: #{asr_beam_search.4} parent=0 // pred_check
    _
  $region35: #{asr_beam_search.4} parent=0 // pred_check_branch
    %526 = sbr.rel (0) target = $region37
  $region36: #{asr_beam_search.4} parent=0 // pred_region
    _
  $region37: #{asr_beam_search.4} parent=0 // pred_fallthru
    _
  // Predicated region
  $region38: #{asr_beam_search.4} parent=0 // pred_check
    _
  $region39: #{asr_beam_search.4} parent=0 // pred_check_branch
    %528 = sbr.rel (0) target = $region41
  $region40: #{asr_beam_search.4} parent=0 // pred_region
    _
  $region41: #{asr_beam_search.4} parent=0 // pred_fallthru
    _

// kernel: asr_beam_search.5
$region0: #{asr_beam_search.5}
  #allocation0 [shape = 'u32[]', space=smem, size = 0x4, offset = 0x4, fixed_abs, tag = 'smem constant byte address 0x4 - core index']
  #allocation1 [shape = 'u32[144,128]{1,0:T(1,128)}', space=vmem, size = 0x12000, scoped, tag = 'internal scratch']
  #allocation2 [shape = 'f32[6,1]{1,0:T(8,128)}', space=vmem, size = 0x1000, scoped, tag = 'scratch operand']
  #allocation3 [shape = 'f32[6,1]{1,0:T(8,128)}', space=vmem, size = 0x1000, scoped, tag = 'scratch operand']
  #allocation4 [shape = 'f32[6,128]{1,0:T(8,128)}', space=vmem, size = 0x1000, scoped, tag = 'scratch operand']
  #allocation5 [shape = 's32[6,128]{1,0:T(8,128)}', space=vmem, size = 0x1000, scoped, tag = 'scratch operand']
  %s0 = inlined_call_operand.vmem [shape: bf16[6,32], index: 0, kind: input, shape index: {}]
  %s1 = inlined_call_operand.vmem [shape: f32[6,1], index: 1, kind: input, shape index: {}]
  %s2 = inlined_call_operand.vmem [shape: bf16[32,128], index: 2, kind: input, shape index: {}]
  %s3 = inlined_call_operand.vmem [shape: f32[1,128], index: 3, kind: input, shape index: {}]
  %s4 = inlined_call_operand.vmem [shape: f32[2,128], index: 4, kind: output, shape index: {0}]
  %s5 = inlined_call_operand.vmem [shape: s32[2,128], index: 5, kind: output, shape index: {1}]
  %6 = xla_tuple %s4, %s5
  %s7 = sld [smem:[#allocation0]]
  $region42: #{asr_beam_search.5} parent=0
    _
  %s9 = ssub.s32 1, %s7
  %s10 = scalar_select 0, %s9, %s7
  // Predicated region
  $region2: #{asr_beam_search.5} parent=0 // pred_check
    _
  $region3: #{asr_beam_search.5} parent=0 // pred_check_branch
    %12 = sbr.rel (0) target = $region5
  $region4: #{asr_beam_search.5} parent=0 // pred_region
    _
  $region5: #{asr_beam_search.5} parent=0 // pred_fallthru
    _
  // Predicated region
  $region6: #{asr_beam_search.5} parent=0 // pred_check
    _
  $region7: #{asr_beam_search.5} parent=0 // pred_check_branch
    %14 = sbr.rel (0) target = $region9
  $region8: #{asr_beam_search.5} parent=0 // pred_region
    _
  $region9: #{asr_beam_search.5} parent=0 // pred_fallthru
    _
  // Predicated region
  $region10: #{asr_beam_search.5} parent=0 // pred_check
    _
  $region11: #{asr_beam_search.5} parent=0 // pred_check_branch
    %16 = sbr.rel (0) target = $region13
  $region12: #{asr_beam_search.5} parent=0 // pred_region
    _
  $region13: #{asr_beam_search.5} parent=0 // pred_fallthru
    _
  // Predicated region
  $region14: #{asr_beam_search.5} parent=0 // pred_check
    _
  $region15: #{asr_beam_search.5} parent=0 // pred_check_branch
    %18 = sbr.rel (0) target = $region17
  $region16: #{asr_beam_search.5} parent=0 // pred_region
    _
  $region17: #{asr_beam_search.5} parent=0 // pred_fallthru
    _
  %p20 = scmp.eq.s32.totalorder 0, 0
  // Predicated region
  $region18: #{asr_beam_search.5} parent=0 // pred_check
    %p21 = pneg %p20
  $region19: #{asr_beam_search.5} parent=0 // pred_check_branch
    %23 = sbr.rel (%p21) target = $region21
  $region20: #{asr_beam_search.5} parent=0 // pred_region
    %vm24 = vcmask 5120
    %25 = vst.msk [vmem:[#allocation2] sm:$0x3f] %vm24, -1e+30
    %26 = vst.msk [vmem:[#allocation3] sm:$0x3f] %vm24, 0.0
    %27 = vst [vmem:[#allocation4] sm:$0x3f] -1e+30
    %28 = vst [vmem:[#allocation5] sm:$0x3f] 0
  $region21: #{asr_beam_search.5} parent=0 // pred_fallthru
    _
  %v29 = vld [vmem:[%s0] sm:$0x7]
  %v30 = vld [vmem:[%s2] sm:$0xf]
  %v31 = vld [vmem:[%s2 + $0x4] sm:$0xf]
  %v32 = vld [vmem:[%s2 + $0x8] sm:$0xf]
  %v33 = vld [vmem:[%s2 + $0xc] sm:$0xf]
  %v34 = vld [vmem:[%s3] sm:$0x1]
  %v36 = vlaneseq
  %v37 = vshrl.u32 %v36, 7
  %v38 = vsub.s32 0, %v37
  %v39 = vrot.slane %v34, %v38
  %v45 = vunpack.c.l.b16 %v30
  %v46 = vunpack.c.l.b16 %v31
  %v47 = vunpack.c.l.b16 %v32
  %v48 = vunpack.c.l.b16 %v33
  %v49 = vpack.c.b16 %v46, %v45
  %v50 = vpack.c.b16 %v48, %v47
  %vm53 = vcmask 261120
  %v55 = vsel %vm53, %v29, 0
  %57 = vmatprep.subr.bf16.mxu0 0
  %58 = vmatpush1.bf16.msra.mxu0 %v49
  %59 = vmatprep.subr.bf16.mxu0 0
  %60 = vmatpush1.bf16.msra.mxu0 %v50
  %61 = vmatprep.subr.bf16.mxu0 0
  %62 = vmatpush1.bf16.msra.mxu0 0
  %63 = vmatprep.subr.bf16.mxu0 0
  %64 = vmatpush1.bf16.msra.mxu0 0
  %65 = vmatprep.subr.bf16.mxu0 0
  %66 = vmatpush1.bf16.msra.mxu0 0
  %67 = vmatprep.subr.bf16.mxu0 0
  %68 = vmatpush1.bf16.msra.mxu0 0
  %69 = vmatprep.subr.bf16.mxu0 0
  %70 = vmatpush1.bf16.msra.mxu0 0
  %71 = vmatprep.subr.bf16.mxu0 0
  %72 = vmatpush1.bf16.msra.mxu0 0
  %73 = vmatprep.subr.bf16.mxu0 0
  %74 = vmatpush1.bf16.msra.mxu0 0
  %75 = vmatprep.subr.bf16.mxu0 0
  %76 = vmatpush1.bf16.msra.mxu0 0
  %77 = vmatprep.subr.bf16.mxu0 0
  %78 = vmatpush1.bf16.msra.mxu0 0
  %79 = vmatprep.subr.bf16.mxu0 0
  %80 = vmatpush1.bf16.msra.mxu0 0
  %81 = vmatprep.subr.bf16.mxu0 0
  %82 = vmatpush1.bf16.msra.mxu0 0
  %83 = vmatprep.subr.bf16.mxu0 0
  %84 = vmatpush1.bf16.msra.mxu0 0
  %85 = vmatprep.subr.bf16.mxu0 0
  %86 = vmatpush1.bf16.msra.mxu0 0
  %87 = vmatprep.subr.bf16.mxu0 0
  %88 = vmatpush1.bf16.msra.mxu0 0
  %89 = vmatprep.mubr.bf16.mxu0 0
  %90 = vmatmul.mubr.bf16.gmra.mrb[0].mxu0 %v55
  %v91 = vpop.f32.mrb[0].mxu0
  %v92 = vadd.f32 %v39, %v91
  %v93 = vpop.f32.mrb[0].mxu0
  %v94 = vpop.f32.mrb[0].mxu0
  %v95 = vpop.f32.mrb[0].mxu0
  %96 = vdwg.mxu0
  %v97 = vld [vmem:[#allocation2] sm:$0x3f]
  %vm98 = vcmask 1045504
  %v99 = vsel %vm98, %v92, -inf
  %100 = vmax.xlane.f32.xlu0 %v99
  %v101 = vpop.xlane.xlu0 %100
  %v102 = vmax.f32 %v97, %v101
  %v103 = vld [vmem:[#allocation3] sm:$0x3f]
  %v104 = vsub.f32 %v97, %v102
  %v105 = vmul.f32 %v104, 1.442695
  %v106 = vpow.pop %v105
  %v107 = vmul.f32 %v103, %v106
  %109 = vset.pattern.permute.xlu0 0
  %110 = vperm.xlu0 %109, %v102
  %v111 = vpop.permute.xlu0 %110
  %v113 = vsub.f32 %v92, %v111
  %v114 = vmul.f32 %v113, 1.442695
  %v115 = vpow.pop %v114
  %v116 = vsel %vm98, %v115, 0.0
  %117 = vadd.xlane.f32.xlu0 %v116
  %v118 = vpop.xlane.xlu0 %117
  %v119 = vadd.f32 %v107, %v118
  %vm120 = vcmask 5120
  %121 = vst.msk [vmem:[#allocation3] sm:$0x3f] %vm120, %v119
  %122 = vst.msk [vmem:[#allocation2] sm:$0x3f] %vm120, %v102
  %s123 = smul.u32 0, 128
  %v124 = vlaneseq
  %v125 = vand.u32 %v124, 127
  %v126 = vstv %s123
  %v127 = vadd.s32 %v126, %v125
  %v128 = vld [vmem:[#allocation4] sm:$0x3f]
  %v129 = vld [vmem:[#allocation5] sm:$0x3f]
  %v130 = vsel %vm98, %v128, -inf
  %v131 = vmax.f32 %v130, %v99
  %132 = vmax.xlane.f32.xlu0 %v131
  %v133 = vpop.xlane.xlu0 %132
  %vm134 = vcmp.eq.f32.partialorder %v128, %v133
  %vm135 = vcmp.eq.f32.partialorder %v92, %v133
  %v136 = vsel %vm134, %v129, 2147483647
  %v137 = vsel %vm135, %v127, 2147483647
  %v138 = vsel %vm98, %v136, 2147483647
  %v139 = vsel %vm98, %v137, 2147483647
  %vm140 = vcmp.lt.s32.totalorder %v138, %v139
  %v141 = vsel %vm140, %v138, %v139
  %v142 = vand.u32 %v141, 65535
  %v143 = vshra.s32 %v141, 16
  %v144 = vcvt.s32.f32 %v142
  %v145 = vcvt.s32.f32 %v143
  %146 = vmin.xlane.f32.xlu0 %v145
  %v147 = vpop.xlane.xlu0 %146
  %vm148 = vcmp.eq.f32.partialorder %v145, %v147
  %v149 = vsel %vm148, %v144, inf
  %150 = vmin.xlane.f32.xlu0 %v149
  %v151 = vpop.xlane.xlu0 %150
  %v152 = vcvt.f32.s32 %v151
  %v153 = vcvt.f32.s32 %v147
  %v154 = vshll.u32 %v153, 16
  %v155 = vadd.s32 %v154, %v152
  %vm156 = vcmp.eq.s32.totalorder %v125, 0
  %v157 = vsel %vm156, %v133, -1e+30
  %v158 = vsel %vm156, %v155, 0
  %vm159 = vcmp.eq.s32.totalorder %v129, %v155
  %vm160 = vcmp.eq.s32.totalorder %v127, %v155
  %v161 = vsel %vm159, -1e+30, %v128
  %v162 = vsel %vm160, -1e+30, %v92
  %v163 = vsel %vm98, %v161, -inf
  %v164 = vsel %vm98, %v162, -inf
  %v165 = vmax.f32 %v163, %v164
  %166 = vmax.xlane.f32.xlu0 %v165
  %v167 = vpop.xlane.xlu0 %166
  %vm168 = vcmp.eq.f32.partialorder %v161, %v167
  %vm169 = vcmp.eq.f32.partialorder %v162, %v167
  %v170 = vsel %vm168, %v129, 2147483647
  %v171 = vsel %vm169, %v127, 2147483647
  %v172 = vsel %vm98, %v170, 2147483647
  %v173 = vsel %vm98, %v171, 2147483647
  %vm174 = vcmp.lt.s32.totalorder %v172, %v173
  %v175 = vsel %vm174, %v172, %v173
  %v176 = vand.u32 %v175, 65535
  %v177 = vshra.s32 %v175, 16
  %v178 = vcvt.s32.f32 %v176
  %v179 = vcvt.s32.f32 %v177
  %180 = vmin.xlane.f32.xlu0 %v179
  %v181 = vpop.xlane.xlu0 %180
  %vm182 = vcmp.eq.f32.partialorder %v179, %v181
  %v183 = vsel %vm182, %v178, inf
  %184 = vmin.xlane.f32.xlu0 %v183
  %v185 = vpop.xlane.xlu0 %184
  %v186 = vcvt.f32.s32 %v185
  %v187 = vcvt.f32.s32 %v181
  %v188 = vshll.u32 %v187, 16
  %v189 = vadd.s32 %v188, %v186
  %vm190 = vcmp.eq.s32.totalorder %v125, 1
  %v191 = vsel %vm190, %v167, %v157
  %v192 = vsel %vm190, %v189, %v158
  %vm193 = vcmp.eq.s32.totalorder %v129, %v189
  %vm194 = vcmp.eq.s32.totalorder %v127, %v189
  %v195 = vsel %vm193, -1e+30, %v161
  %v196 = vsel %vm194, -1e+30, %v162
  %v197 = vsel %vm98, %v195, -inf
  %v198 = vsel %vm98, %v196, -inf
  %v199 = vmax.f32 %v197, %v198
  %200 = vmax.xlane.f32.xlu0 %v199
  %v201 = vpop.xlane.xlu0 %200
  %vm202 = vcmp.eq.f32.partialorder %v195, %v201
  %vm203 = vcmp.eq.f32.partialorder %v196, %v201
  %v204 = vsel %vm202, %v129, 2147483647
  %v205 = vsel %vm203, %v127, 2147483647
  %v206 = vsel %vm98, %v204, 2147483647
  %v207 = vsel %vm98, %v205, 2147483647
  %vm208 = vcmp.lt.s32.totalorder %v206, %v207
  %v209 = vsel %vm208, %v206, %v207
  %v210 = vand.u32 %v209, 65535
  %v211 = vshra.s32 %v209, 16
  %v212 = vcvt.s32.f32 %v210
  %v213 = vcvt.s32.f32 %v211
  %214 = vmin.xlane.f32.xlu0 %v213
  %v215 = vpop.xlane.xlu0 %214
  %vm216 = vcmp.eq.f32.partialorder %v213, %v215
  %v217 = vsel %vm216, %v212, inf
  %218 = vmin.xlane.f32.xlu0 %v217
  %v219 = vpop.xlane.xlu0 %218
  %v220 = vcvt.f32.s32 %v219
  %v221 = vcvt.f32.s32 %v215
  %v222 = vshll.u32 %v221, 16
  %v223 = vadd.s32 %v222, %v220
  %vm224 = vcmp.eq.s32.totalorder %v125, 2
  %v225 = vsel %vm224, %v201, %v191
  %v226 = vsel %vm224, %v223, %v192
  %227 = vst [vmem:[#allocation4] sm:$0x3f] %v225
  %228 = vst [vmem:[#allocation5] sm:$0x3f] %v226
  // Predicated region
  $region22: #{asr_beam_search.5} parent=0 // pred_check
    %p229 = pneg %p20
  $region23: #{asr_beam_search.5} parent=0 // pred_check_branch
    %231 = sbr.rel (%p229) target = $region25
  $region24: #{asr_beam_search.5} parent=0 // pred_region
    %v232 = vld [vmem:[#allocation2] sm:$0x3f]
    %v233 = vld [vmem:[#allocation3] sm:$0x3f]
    %v234 = vlog2.pop %v233
    %v235 = vmul.f32 %v234, 0.6931472
    %v236 = vadd.f32 %v232, %v235
    %v237 = vld [vmem:[%s1] sm:$0x3f]
    %v238 = vld [vmem:[#allocation4] sm:$0x3f]
    %240 = vset.pattern.permute.xlu0 0
    %241 = vperm.xlu0 %240, %v237
    %v242 = vpop.permute.xlu0 %241
    %v244 = vadd.f32 %v242, %v238
    %246 = vset.pattern.permute.xlu0 0
    %247 = vperm.xlu0 %246, %v236
    %v248 = vpop.permute.xlu0 %247
    %v250 = vsub.f32 %v244, %v248
    %v251 = vlaneseq
    %v252 = vshrl.u32 %v251, 7
    %vm253 = vcmp.ge.s32.totalorder %v252, 0
    %vm254 = vcmp.lt.s32.totalorder %v252, 3
    %vm255 = vmand %vm253, %vm254
    %v256 = vsel %vm255, %v250, -1e+30
    %v257 = vmul.u32 %v252, 128
    %v258 = vld [vmem:[#allocation5] sm:$0x3f]
    %v259 = vadd.s32 %v257, %v258
    %v260 = vsel %vm255, %v259, 2147483647
    %v261 = vsel %vm98, %v256, -inf
    %262 = vmax.xlane.f32.xlu0 %v261
    %v263 = vpop.xlane.xlu0 %262
    %v264 = vsel %vm98, %v263, -inf
    %v265 = vrot.slane %v264, 4
    %v266 = vmax.f32 %v264, %v265
    %v267 = vrot.slane %v266, 2
    %v268 = vmax.f32 %v266, %v267
    %v269 = vrot.slane %v268, 1
    %v270 = vmax.f32 %v268, %v269
    %vm271 = vcmp.eq.f32.partialorder %v256, %v270
    %v272 = vsel %vm271, %v260, 2147483647
    %v273 = vsel %vm98, %v272, 2147483647
    %v274 = vand.u32 %v273, 65535
    %v275 = vshra.s32 %v273, 16
    %v276 = vcvt.s32.f32 %v274
    %v277 = vcvt.s32.f32 %v275
    %278 = vmin.xlane.f32.xlu0 %v277
    %v279 = vpop.xlane.xlu0 %278
    %vm280 = vcmp.eq.f32.partialorder %v277, %v279
    %v281 = vsel %vm280, %v276, inf
    %282 = vmin.xlane.f32.xlu0 %v281
    %v283 = vpop.xlane.xlu0 %282
    %v284 = vcvt.f32.s32 %v283
    %v285 = vcvt.f32.s32 %v279
    %v286 = vshll.u32 %v285, 16
    %v287 = vadd.s32 %v286, %v284
    %v288 = vsel %vm98, %v287, 2147483647
    %v289 = vrot.slane %v288, 4
    %vm290 = vcmp.lt.s32.totalorder %v288, %v289
    %v291 = vsel %vm290, %v288, %v289
    %v292 = vrot.slane %v291, 2
    %vm293 = vcmp.lt.s32.totalorder %v291, %v292
    %v294 = vsel %vm293, %v291, %v292
    %v295 = vrot.slane %v294, 1
    %vm296 = vcmp.lt.s32.totalorder %v294, %v295
    %v297 = vsel %vm296, %v294, %v295
    %vm298 = vcmp.eq.s32.totalorder %v252, 0
    %vm299 = vmand %vm298, %vm156
    %v300 = vsel %vm299, %v270, -1e+30
    %v301 = vsel %vm299, %v297, 0
    %vm302 = vcmp.eq.s32.totalorder %v260, %v297
    %v303 = vsel %vm302, -1e+30, %v256
    %v304 = vsel %vm98, %v303, -inf
    %305 = vmax.xlane.f32.xlu0 %v304
    %v306 = vpop.xlane.xlu0 %305
    %v307 = vsel %vm98, %v306, -inf
    %v308 = vrot.slane %v307, 4
    %v309 = vmax.f32 %v307, %v308
    %v310 = vrot.slane %v309, 2
    %v311 = vmax.f32 %v309, %v310
    %v312 = vrot.slane %v311, 1
    %v313 = vmax.f32 %v311, %v312
    %vm314 = vcmp.eq.f32.partialorder %v303, %v313
    %v315 = vsel %vm314, %v260, 2147483647
    %v316 = vsel %vm98, %v315, 2147483647
    %v317 = vand.u32 %v316, 65535
    %v318 = vshra.s32 %v316, 16
    %v319 = vcvt.s32.f32 %v317
    %v320 = vcvt.s32.f32 %v318
    %321 = vmin.xlane.f32.xlu0 %v320
    %v322 = vpop.xlane.xlu0 %321
    %vm323 = vcmp.eq.f32.partialorder %v320, %v322
    %v324 = vsel %vm323, %v319, inf
    %325 = vmin.xlane.f32.xlu0 %v324
    %v326 = vpop.xlane.xlu0 %325
    %v327 = vcvt.f32.s32 %v326
    %v328 = vcvt.f32.s32 %v322
    %v329 = vshll.u32 %v328, 16
    %v330 = vadd.s32 %v329, %v327
    %v331 = vsel %vm98, %v330, 2147483647
    %v332 = vrot.slane %v331, 4
    %vm333 = vcmp.lt.s32.totalorder %v331, %v332
    %v334 = vsel %vm333, %v331, %v332
    %v335 = vrot.slane %v334, 2
    %vm336 = vcmp.lt.s32.totalorder %v334, %v335
    %v337 = vsel %vm336, %v334, %v335
    %v338 = vrot.slane %v337, 1
    %vm339 = vcmp.lt.s32.totalorder %v337, %v338
    %v340 = vsel %vm339, %v337, %v338
    %vm341 = vmand %vm298, %vm190
    %v342 = vsel %vm341, %v313, %v300
    %v343 = vsel %vm341, %v340, %v301
    %vm344 = vcmp.eq.s32.totalorder %v260, %v340
    %v345 = vsel %vm344, -1e+30, %v303
    %v346 = vsel %vm98, %v345, -inf
    %347 = vmax.xlane.f32.xlu0 %v346
    %v348 = vpop.xlane.xlu0 %347
    %v349 = vsel %vm98, %v348, -inf
    %v350 = vrot.slane %v349, 4
    %v351 = vmax.f32 %v349, %v350
    %v352 = vrot.slane %v351, 2
    %v353 = vmax.f32 %v351, %v352
    %v354 = vrot.slane %v353, 1
    %v355 = vmax.f32 %v353, %v354
    %vm356 = vcmp.eq.f32.partialorder %v345, %v355
    %v357 = vsel %vm356, %v260, 2147483647
    %v358 = vsel %vm98, %v357, 2147483647
    %v359 = vand.u32 %v358, 65535
    %v360 = vshra.s32 %v358, 16
    %v361 = vcvt.s32.f32 %v359
    %v362 = vcvt.s32.f32 %v360
    %363 = vmin.xlane.f32.xlu0 %v362
    %v364 = vpop.xlane.xlu0 %363
    %vm365 = vcmp.eq.f32.partialorder %v362, %v364
    %v366 = vsel %vm365, %v361, inf
    %367 = vmin.xlane.f32.xlu0 %v366
    %v368 = vpop.xlane.xlu0 %367
    %v369 = vcvt.f32.s32 %v368
    %v370 = vcvt.f32.s32 %v364
    %v371 = vshll.u32 %v370, 16
    %v372 = vadd.s32 %v371, %v369
    %v373 = vsel %vm98, %v372, 2147483647
    %v374 = vrot.slane %v373, 4
    %vm375 = vcmp.lt.s32.totalorder %v373, %v374
    %v376 = vsel %vm375, %v373, %v374
    %v377 = vrot.slane %v376, 2
    %vm378 = vcmp.lt.s32.totalorder %v376, %v377
    %v379 = vsel %vm378, %v376, %v377
    %v380 = vrot.slane %v379, 1
    %vm381 = vcmp.lt.s32.totalorder %v379, %v380
    %v382 = vsel %vm381, %v379, %v380
    %vm383 = vmand %vm298, %vm224
    %v384 = vsel %vm383, %v355, %v342
    %v385 = vsel %vm383, %v382, %v343
    %vm386 = vcmp.ge.s32.totalorder %v252, 3
    %vm387 = vcmp.lt.s32.totalorder %v252, 6
    %vm388 = vmand %vm386, %vm387
    %v389 = vsel %vm388, %v250, -1e+30
    %v390 = vsub.s32 %v252, 3
    %v391 = vmul.u32 %v390, 128
    %v392 = vadd.s32 %v391, %v258
    %v393 = vsel %vm388, %v392, 2147483647
    %v394 = vsel %vm98, %v389, -inf
    %395 = vmax.xlane.f32.xlu0 %v394
    %v396 = vpop.xlane.xlu0 %395
    %v397 = vsel %vm98, %v396, -inf
    %v398 = vrot.slane %v397, 4
    %v399 = vmax.f32 %v397, %v398
    %v400 = vrot.slane %v399, 2
    %v401 = vmax.f32 %v399, %v400
    %v402 = vrot.slane %v401, 1
    %v403 = vmax.f32 %v401, %v402
    %vm404 = vcmp.eq.f32.partialorder %v389, %v403
    %v405 = vsel %vm404, %v393, 2147483647
    %v406 = vsel %vm98, %v405, 2147483647
    %v407 = vand.u32 %v406, 65535
    %v408 = vshra.s32 %v406, 16
    %v409 = vcvt.s32.f32 %v407
    %v410 = vcvt.s32.f32 %v408
    %411 = vmin.xlane.f32.xlu0 %v410
    %v412 = vpop.xlane.xlu0 %411
    %vm413 = vcmp.eq.f32.partialorder %v410, %v412
    %v414 = vsel %vm413, %v409, inf
    %415 = vmin.xlane.f32.xlu0 %v414
    %v416 = vpop.xlane.xlu0 %415
    %v417 = vcvt.f32.s32 %v416
    %v418 = vcvt.f32.s32 %v412
    %v419 = vshll.u32 %v418, 16
    %v420 = vadd.s32 %v419, %v417
    %v421 = vsel %vm98, %v420, 2147483647
    %v422 = vrot.slane %v421, 4
    %vm423 = vcmp.lt.s32.totalorder %v421, %v422
    %v424 = vsel %vm423, %v421, %v422
    %v425 = vrot.slane %v424, 2
    %vm426 = vcmp.lt.s32.totalorder %v424, %v425
    %v427 = vsel %vm426, %v424, %v425
    %v428 = vrot.slane %v427, 1
    %vm429 = vcmp.lt.s32.totalorder %v427, %v428
    %v430 = vsel %vm429, %v427, %v428
    %vm431 = vcmp.eq.s32.totalorder %v252, 1
    %vm432 = vmand %vm431, %vm156
    %v433 = vsel %vm432, %v403, %v384
    %v434 = vsel %vm432, %v430, %v385
    %vm435 = vcmp.eq.s32.totalorder %v393, %v430
    %v436 = vsel %vm435, -1e+30, %v389
    %v437 = vsel %vm98, %v436, -inf
    %438 = vmax.xlane.f32.xlu0 %v437
    %v439 = vpop.xlane.xlu0 %438
    %v440 = vsel %vm98, %v439, -inf
    %v441 = vrot.slane %v440, 4
    %v442 = vmax.f32 %v440, %v441
    %v443 = vrot.slane %v442, 2
    %v444 = vmax.f32 %v442, %v443
    %v445 = vrot.slane %v444, 1
    %v446 = vmax.f32 %v444, %v445
    %vm447 = vcmp.eq.f32.partialorder %v436, %v446
    %v448 = vsel %vm447, %v393, 2147483647
    %v449 = vsel %vm98, %v448, 2147483647
    %v450 = vand.u32 %v449, 65535
    %v451 = vshra.s32 %v449, 16
    %v452 = vcvt.s32.f32 %v450
    %v453 = vcvt.s32.f32 %v451
    %454 = vmin.xlane.f32.xlu0 %v453
    %v455 = vpop.xlane.xlu0 %454
    %vm456 = vcmp.eq.f32.partialorder %v453, %v455
    %v457 = vsel %vm456, %v452, inf
    %458 = vmin.xlane.f32.xlu0 %v457
    %v459 = vpop.xlane.xlu0 %458
    %v460 = vcvt.f32.s32 %v459
    %v461 = vcvt.f32.s32 %v455
    %v462 = vshll.u32 %v461, 16
    %v463 = vadd.s32 %v462, %v460
    %v464 = vsel %vm98, %v463, 2147483647
    %v465 = vrot.slane %v464, 4
    %vm466 = vcmp.lt.s32.totalorder %v464, %v465
    %v467 = vsel %vm466, %v464, %v465
    %v468 = vrot.slane %v467, 2
    %vm469 = vcmp.lt.s32.totalorder %v467, %v468
    %v470 = vsel %vm469, %v467, %v468
    %v471 = vrot.slane %v470, 1
    %vm472 = vcmp.lt.s32.totalorder %v470, %v471
    %v473 = vsel %vm472, %v470, %v471
    %vm474 = vmand %vm431, %vm190
    %v475 = vsel %vm474, %v446, %v433
    %v476 = vsel %vm474, %v473, %v434
    %vm477 = vcmp.eq.s32.totalorder %v393, %v473
    %v478 = vsel %vm477, -1e+30, %v436
    %v479 = vsel %vm98, %v478, -inf
    %480 = vmax.xlane.f32.xlu0 %v479
    %v481 = vpop.xlane.xlu0 %480
    %v482 = vsel %vm98, %v481, -inf
    %v483 = vrot.slane %v482, 4
    %v484 = vmax.f32 %v482, %v483
    %v485 = vrot.slane %v484, 2
    %v486 = vmax.f32 %v484, %v485
    %v487 = vrot.slane %v486, 1
    %v488 = vmax.f32 %v486, %v487
    %vm489 = vcmp.eq.f32.partialorder %v478, %v488
    %v490 = vsel %vm489, %v393, 2147483647
    %v491 = vsel %vm98, %v490, 2147483647
    %v492 = vand.u32 %v491, 65535
    %v493 = vshra.s32 %v491, 16
    %v494 = vcvt.s32.f32 %v492
    %v495 = vcvt.s32.f32 %v493
    %496 = vmin.xlane.f32.xlu0 %v495
    %v497 = vpop.xlane.xlu0 %496
    %vm498 = vcmp.eq.f32.partialorder %v495, %v497
    %v499 = vsel %vm498, %v494, inf
    %500 = vmin.xlane.f32.xlu0 %v499
    %v501 = vpop.xlane.xlu0 %500
    %v502 = vcvt.f32.s32 %v501
    %v503 = vcvt.f32.s32 %v497
    %v504 = vshll.u32 %v503, 16
    %v505 = vadd.s32 %v504, %v502
    %v506 = vsel %vm98, %v505, 2147483647
    %v507 = vrot.slane %v506, 4
    %vm508 = vcmp.lt.s32.totalorder %v506, %v507
    %v509 = vsel %vm508, %v506, %v507
    %v510 = vrot.slane %v509, 2
    %vm511 = vcmp.lt.s32.totalorder %v509, %v510
    %v512 = vsel %vm511, %v509, %v510
    %v513 = vrot.slane %v512, 1
    %vm514 = vcmp.lt.s32.totalorder %v512, %v513
    %v515 = vsel %vm514, %v512, %v513
    %vm516 = vmand %vm431, %vm224
    %v517 = vsel %vm516, %v488, %v475
    %v518 = vsel %vm516, %v515, %v476
    %519 = vst [vmem:[%s4] sm:$0x3] %v517
    %520 = vst [vmem:[%s5] sm:$0x3] %v518
  $region25: #{asr_beam_search.5} parent=0 // pred_fallthru
    _
  // Predicated region
  $region26: #{asr_beam_search.5} parent=0 // pred_check
    _
  $region27: #{asr_beam_search.5} parent=0 // pred_check_branch
    %522 = sbr.rel (0) target = $region29
  $region28: #{asr_beam_search.5} parent=0 // pred_region
    _
  $region29: #{asr_beam_search.5} parent=0 // pred_fallthru
    _
  // Predicated region
  $region30: #{asr_beam_search.5} parent=0 // pred_check
    _
  $region31: #{asr_beam_search.5} parent=0 // pred_check_branch
    %524 = sbr.rel (0) target = $region33
  $region32: #{asr_beam_search.5} parent=0 // pred_region
    _
  $region33: #{asr_beam_search.5} parent=0 // pred_fallthru
    _
  // Predicated region
  $region34: #{asr_beam_search.5} parent=0 // pred_check
    _
  $region35: #{asr_beam_search.5} parent=0 // pred_check_branch
    %526 = sbr.rel (0) target = $region37
  $region36: #{asr_beam_search.5} parent=0 // pred_region
    _
  $region37: #{asr_beam_search.5} parent=0 // pred_fallthru
    _
  // Predicated region
  $region38: #{asr_beam_search.5} parent=0 // pred_check
    _
  $region39: #{asr_beam_search.5} parent=0 // pred_check_branch
    %528 = sbr.rel (0) target = $region41
  $region40: #{asr_beam_search.5} parent=0 // pred_region
    _
  $region41: #{asr_beam_search.5} parent=0 // pred_fallthru
    _

</llo_original>
